<compile_context>
chip_gen: v7x
topology: tpu7x:2x2x1
jax: 0.10.0
libtpu: 0.0.40
codegen_flags: <defaults>
</compile_context>

<pallas_src>
import functools

import numpy as np
import jax
import jax.numpy as jnp
from jax.experimental import pallas as pl
from jax.experimental.pallas import tpu as pltpu

HIDDEN = 128
SIGMA_INIT = 0.017
OUT_ALIGN = 8  # sublane-aligned output width; masked lane stores are cheap here


def _round_up(x, m):
    return (x + m - 1) // m * m


def _cdiv(a, b):
    return (a + b - 1) // b


# --------------------------------------------------------------------------- #
# Kernel: one batch tile, all three layers fused.
# --------------------------------------------------------------------------- #
def dqn_kernel(x_ref, w1_ref, b1_ref, w2_ref, b2_ref, w3_ref, b3_ref, o_ref):
    cd = w1_ref.dtype  # matmul-input dtype (bf16 default / f32 strict path)
    # f32 path: force full-precision MXU passes for strict parity with PyTorch.
    prec = jax.lax.Precision.HIGHEST if cd == jnp.float32 else None

    h = jnp.dot(x_ref[...], w1_ref[...],
                preferred_element_type=jnp.float32, precision=prec)
    h = jnp.maximum(h + b1_ref[...], 0.0)

    h = jnp.dot(h.astype(cd), w2_ref[...],
                preferred_element_type=jnp.float32, precision=prec)
    h = jnp.maximum(h + b2_ref[...], 0.0)

    out = jnp.dot(h.astype(cd), w3_ref[...],
                  preferred_element_type=jnp.float32, precision=prec)
    o_ref[...] = (out + b3_ref[...]).astype(o_ref.dtype)


# --------------------------------------------------------------------------- #
# Wrapper: large batch tiles, even tile count, narrow output, resident weights.
# --------------------------------------------------------------------------- #
def _vmem_limit_bytes(tb, S, n_pad, matmul_bytes):
    weights = 2 * (S * HIDDEN + HIDDEN * HIDDEN + HIDDEN * n_pad) * matmul_bytes
    biases = 2 * (2 * HIDDEN + n_pad) * 4
    io = 2 * tb * S * matmul_bytes + 2 * tb * n_pad * 4     # double-buffered in/out
    inter = 4 * tb * HIDDEN * 4                              # f32 intermediates
    est = weights + biases + io + inter
    return int(min(max(2 * est, 32 * 1024 * 1024), 64 * 1024 * 1024))


@functools.partial(jax.jit, static_argnames=("action_size", "batch_tile"))
def dqn_forward(x, eff, *, action_size, batch_tile=2048):
    """x: (B, state_size). eff: dict from make_effective_params()."""
    B, S = x.shape
    w1, b1 = eff["w1"], eff["b1"]
    w2, b2 = eff["w2"], eff["b2"]
    w3, b3 = eff["w3"], eff["b3"]
    n_pad = w3.shape[1]          # sublane-padded output width (multiple of 8)
    cd = w1.dtype                # matmul-input dtype

    # Tile count: >=2 and even so both v7x TensorCores are fed; tile size from
    # cdiv(B, num_tiles) rounded to 8 sublanes, keeping batch-padding waste < 8*tiles.
    num_tiles = max(2, _cdiv(B, batch_tile))
    if num_tiles % 2:
        num_tiles += 1
    tb = _round_up(_cdiv(B, num_tiles), 8)
    bp = tb * num_tiles

    # Cast x to the matmul dtype (bf16 default) and pad the batch.
    x = x.astype(cd)
    if bp != B:
        x = jnp.pad(x, ((0, bp - B), (0, 0)))

    const = lambda i: (0, 0)  # weights/biases: same block every tile -> VMEM-resident

    out = pl.pallas_call(
        dqn_kernel,
        out_shape=jax.ShapeDtypeStruct((bp, n_pad), jnp.float32),
        grid_spec=pltpu.PrefetchScalarGridSpec(
            num_scalar_prefetch=0,
            grid=(num_tiles,),
            in_specs=[
                pl.BlockSpec((tb, S), lambda i: (i, 0)),
                pl.BlockSpec(w1.shape, const),
                pl.BlockSpec(b1.shape, const),
                pl.BlockSpec(w2.shape, const),
                pl.BlockSpec(b2.shape, const),
                pl.BlockSpec(w3.shape, const),
                pl.BlockSpec(b3.shape, const),
            ],
            out_specs=pl.BlockSpec((tb, n_pad), lambda i: (i, 0)),
        ),
        compiler_params=pltpu.CompilerParams(
            dimension_semantics=("parallel",),  # shard batch tiles across TCs (v7x)
            vmem_limit_bytes=_vmem_limit_bytes(tb, S, n_pad, jnp.dtype(cd).itemsize),
        ),
    )(x, w1, b1, w2, b2, w3, b3)

    # Narrow (n_pad=8) output -> this slice is a tiny copy.
    return out[:B, :action_size]


# --------------------------------------------------------------------------- #
# Parameter construction (matches NoisyLinear reset_parameters/reset_noise).
# --------------------------------------------------------------------------- #
def init_noisy_layer(key, in_features, out_features):
    k_wmu, k_bmu, k_weps, k_beps = jax.random.split(key, 4)
    mu_range = 1.0 / np.sqrt(in_features)
    return dict(
        weight_mu=jax.random.uniform(
            k_wmu, (out_features, in_features), jnp.float32, -mu_range, mu_range),
        weight_sigma=jnp.full((out_features, in_features), SIGMA_INIT, jnp.float32),
        weight_epsilon=jax.random.normal(
            k_weps, (out_features, in_features), jnp.float32),
        bias_mu=jax.random.uniform(
            k_bmu, (out_features,), jnp.float32, -mu_range, mu_range),
        bias_sigma=jnp.full((out_features,), SIGMA_INIT, jnp.float32),
        bias_epsilon=jax.random.normal(k_beps, (out_features,), jnp.float32),
    )


def init_dqn(key, state_size, action_size):
    k1, k2, k3 = jax.random.split(key, 3)
    return {
        "fc1": init_noisy_layer(k1, state_size, HIDDEN),
        "fc2": init_noisy_layer(k2, HIDDEN, HIDDEN),
        "fc3": init_noisy_layer(k3, HIDDEN, action_size),
    }


def make_effective_params(params, *, training=True, matmul_dtype=jnp.bfloat16):
    """Combine noise ONCE (per reset_noise), transpose to (in, out), pad the output
    layer to a multiple of 8 lanes, cast weights to the matmul dtype (bf16 default).
    Biases stay f32 (bias-add / ReLU run on the VPU in f32)."""
    def eff(layer, pad_out=None):
        if training:
            w = layer["weight_mu"] + layer["weight_sigma"] * layer["weight_epsilon"]
            b = layer["bias_mu"] + layer["bias_sigma"] * layer["bias_epsilon"]
        else:  # eval mode of NoisyLinear
            w = layer["weight_mu"]
            b = layer["bias_mu"]
        w = w.T  # (in, out): canonical MXU layout
        if pad_out is not None and w.shape[1] != pad_out:
            w = jnp.pad(w, ((0, 0), (0, pad_out - w.shape[1])))
            b = jnp.pad(b, ((0, pad_out - b.shape[0]),))
        return w.astype(matmul_dtype), b[None, :].astype(jnp.float32)

    action_size = params["fc3"]["weight_mu"].shape[0]
    n_pad = _round_up(action_size, OUT_ALIGN)
    w1, b1 = eff(params["fc1"])
    w2, b2 = eff(params["fc2"])
    w3, b3 = eff(params["fc3"], pad_out=n_pad)
    return {"w1": w1, "b1": b1, "w2": w2, "b2": b2, "w3": w3, "b3": b3}


# --------------------------------------------------------------------------- #
# Pure-JAX reference (training-mode NoisyLinear forward, PyTorch semantics).
# --------------------------------------------------------------------------- #
def dqn_reference(x, params, *, training=True):
    def lin(h, layer):
        if training:
            w = layer["weight_mu"] + layer["weight_sigma"] * layer["weight_epsilon"]
            b = layer["bias_mu"] + layer["bias_sigma"] * layer["bias_epsilon"]
        else:
            w = layer["weight_mu"]
            b = layer["bias_mu"]
        return h @ w.T + b

    h = jnp.maximum(lin(x, params["fc1"]), 0.0)
    h = jnp.maximum(lin(h, params["fc2"]), 0.0)
    return lin(h, params["fc3"])


if __name__ == "__main__":
    key = jax.random.PRNGKey(0)
    k_params, k_x = jax.random.split(key)

    batch = 2
    state_size = 16
    action_size = 4

    params = init_dqn(k_params, state_size, action_size)
    x = jax.random.normal(k_x, (batch, state_size), jnp.float32)

    ref = dqn_reference(x, params, training=True)

    # f32 matmul-input path (precision=HIGHEST on the MXU): strict PyTorch parity.
    eff_f32 = make_effective_params(params, training=True, matmul_dtype=jnp.float32)
    out = jax.block_until_ready(dqn_forward(x, eff_f32, action_size=action_size))
    np.testing.assert_allclose(np.asarray(out), np.asarray(ref), rtol=1e-5, atol=1e-5)

    # Default bf16 path (f32 accumulation): half the weight/activation bytes, 2x MXU.
    eff_bf16 = make_effective_params(params, training=True)  # bf16 default
    out_bf16 = jax.block_until_ready(dqn_forward(x, eff_bf16, action_size=action_size))
    np.testing.assert_allclose(np.asarray(out_bf16), np.asarray(ref), rtol=5e-2, atol=5e-2)

    print("KERNEL_OK")
</pallas_src>

<mosaic_0001>
module attributes {stable_mosaic.version = 11 : i64} {
  func.func @dqn_kernel(%arg0: i32, %arg1: memref<8x16xf32, #tpu.memory_space<vmem>>, %arg2: memref<16x128xf32, #tpu.memory_space<vmem>>, %arg3: memref<1x128xf32, #tpu.memory_space<vmem>>, %arg4: memref<128x128xf32, #tpu.memory_space<vmem>>, %arg5: memref<1x128xf32, #tpu.memory_space<vmem>>, %arg6: memref<128x8xf32, #tpu.memory_space<vmem>>, %arg7: memref<1x8xf32, #tpu.memory_space<vmem>>, %arg8: memref<8x8xf32, #tpu.memory_space<vmem>>) attributes {dimension_semantics = [#tpu.dimension_semantics<parallel>], iteration_bounds = array<i64: 2>, scalar_prefetch = 0 : i64, scratch_operands = 0 : i64, tpu.core_type = #tpu.core_type<tc>, window_params = [{transform_indices = @transform_0, window_bounds = array<i64: 8, 16>}, {pipeline_mode = #tpu.pipeline_mode<synchronous>, transform_indices = @transform_1, window_bounds = array<i64: 16, 128>}, {pipeline_mode = #tpu.pipeline_mode<synchronous>, transform_indices = @transform_2, window_bounds = array<i64: 1, 128>}, {pipeline_mode = #tpu.pipeline_mode<synchronous>, transform_indices = @transform_3, window_bounds = array<i64: 128, 128>}, {pipeline_mode = #tpu.pipeline_mode<synchronous>, transform_indices = @transform_4, window_bounds = array<i64: 1, 128>}, {pipeline_mode = #tpu.pipeline_mode<synchronous>, transform_indices = @transform_5, window_bounds = array<i64: 128, 8>}, {pipeline_mode = #tpu.pipeline_mode<synchronous>, transform_indices = @transform_6, window_bounds = array<i64: 1, 8>}, {transform_indices = @transform_7, window_bounds = array<i64: 8, 8>}]} {
    %c0 = arith.constant 0 : index
    %c0_0 = arith.constant 0 : index
    %0 = vector.load %arg1[%c0, %c0_0] : memref<8x16xf32, #tpu.memory_space<vmem>>, vector<8x16xf32>
    %c0_1 = arith.constant 0 : index
    %c0_2 = arith.constant 0 : index
    %1 = vector.load %arg2[%c0_1, %c0_2] : memref<16x128xf32, #tpu.memory_space<vmem>>, vector<16x128xf32>
    %cst = arith.constant dense<0.000000e+00> : vector<8x128xf32>
    %2 = tpu.matmul %0, %1, %cst {dimension_numbers = #tpu.dot_dimension_numbers<[1], [0], [0], [1], [0, 0, 1, 1], [], []>, precision = #tpu.contract_precision<fp32>} : vector<8x16xf32>, vector<16x128xf32>, vector<8x128xf32> -> vector<8x128xf32>
    %c0_3 = arith.constant 0 : index
    %c0_4 = arith.constant 0 : index
    %3 = vector.load %arg3[%c0_3, %c0_4] : memref<1x128xf32, #tpu.memory_space<vmem>>, vector<1x128xf32>
    %4 = vector.broadcast %3 : vector<1x128xf32> to vector<8x128xf32>
    %5 = arith.addf %2, %4 : vector<8x128xf32>
    %cst_5 = arith.constant 0.000000e+00 : f32
    %6 = vector.broadcast %cst_5 : f32 to vector<8x128xf32>
    %7 = arith.maximumf %5, %6 : vector<8x128xf32>
    %c0_6 = arith.constant 0 : index
    %c0_7 = arith.constant 0 : index
    %8 = vector.load %arg4[%c0_6, %c0_7] : memref<128x128xf32, #tpu.memory_space<vmem>>, vector<128x128xf32>
    %cst_8 = arith.constant dense<0.000000e+00> : vector<8x128xf32>
    %9 = tpu.matmul %7, %8, %cst_8 {dimension_numbers = #tpu.dot_dimension_numbers<[1], [0], [0], [1], [0, 0, 1, 1], [], []>, precision = #tpu.contract_precision<fp32>} : vector<8x128xf32>, vector<128x128xf32>, vector<8x128xf32> -> vector<8x128xf32>
    %c0_9 = arith.constant 0 : index
    %c0_10 = arith.constant 0 : index
    %10 = vector.load %arg5[%c0_9, %c0_10] : memref<1x128xf32, #tpu.memory_space<vmem>>, vector<1x128xf32>
    %11 = vector.broadcast %10 : vector<1x128xf32> to vector<8x128xf32>
    %12 = arith.addf %9, %11 : vector<8x128xf32>
    %cst_11 = arith.constant 0.000000e+00 : f32
    %13 = vector.broadcast %cst_11 : f32 to vector<8x128xf32>
    %14 = arith.maximumf %12, %13 : vector<8x128xf32>
    %c0_12 = arith.constant 0 : index
    %c0_13 = arith.constant 0 : index
    %15 = vector.load %arg6[%c0_12, %c0_13] : memref<128x8xf32, #tpu.memory_space<vmem>>, vector<128x8xf32>
    %cst_14 = arith.constant dense<0.000000e+00> : vector<8x8xf32>
    %16 = tpu.matmul %14, %15, %cst_14 {dimension_numbers = #tpu.dot_dimension_numbers<[1], [0], [0], [1], [0, 0, 1, 1], [], []>, precision = #tpu.contract_precision<fp32>} : vector<8x128xf32>, vector<128x8xf32>, vector<8x8xf32> -> vector<8x8xf32>
    %c0_15 = arith.constant 0 : index
    %c0_16 = arith.constant 0 : index
    %17 = vector.load %arg7[%c0_15, %c0_16] : memref<1x8xf32, #tpu.memory_space<vmem>>, vector<1x8xf32>
    %18 = vector.broadcast %17 : vector<1x8xf32> to vector<8x8xf32>
    %19 = arith.addf %16, %18 : vector<8x8xf32>
    %c0_17 = arith.constant 0 : index
    %c0_18 = arith.constant 0 : index
    %20 = vector.load %arg8[%c0_17, %c0_18] : memref<8x8xf32, #tpu.memory_space<vmem>>, vector<8x8xf32>
    tpu.vector_store %arg8[%c0_17, %c0_18], %19 {strides = array<i32>} : memref<8x8xf32, #tpu.memory_space<vmem>>, vector<8x8xf32>,
    return
  }
  func.func @transform_0(%arg0: i32) -> (i32, i32) {
    %c0_i32 = arith.constant 0 : i32
    %c0_i32_0 = arith.constant 0 : i32
    return %arg0, %c0_i32 : i32, i32
  }
  func.func @transform_1(%arg0: i32) -> (i32, i32) {
    %c0_i32 = arith.constant 0 : i32
    %c0_i32_0 = arith.constant 0 : i32
    %c0_i32_1 = arith.constant 0 : i32
    return %c0_i32, %c0_i32_0 : i32, i32
  }
  func.func @transform_2(%arg0: i32) -> (i32, i32) {
    %c0_i32 = arith.constant 0 : i32
    %c0_i32_0 = arith.constant 0 : i32
    %c0_i32_1 = arith.constant 0 : i32
    return %c0_i32, %c0_i32_0 : i32, i32
  }
  func.func @transform_3(%arg0: i32) -> (i32, i32) {
    %c0_i32 = arith.constant 0 : i32
    %c0_i32_0 = arith.constant 0 : i32
    %c0_i32_1 = arith.constant 0 : i32
    return %c0_i32, %c0_i32_0 : i32, i32
  }
  func.func @transform_4(%arg0: i32) -> (i32, i32) {
    %c0_i32 = arith.constant 0 : i32
    %c0_i32_0 = arith.constant 0 : i32
    %c0_i32_1 = arith.constant 0 : i32
    return %c0_i32, %c0_i32_0 : i32, i32
  }
  func.func @transform_5(%arg0: i32) -> (i32, i32) {
    %c0_i32 = arith.constant 0 : i32
    %c0_i32_0 = arith.constant 0 : i32
    %c0_i32_1 = arith.constant 0 : i32
    return %c0_i32, %c0_i32_0 : i32, i32
  }
  func.func @transform_6(%arg0: i32) -> (i32, i32) {
    %c0_i32 = arith.constant 0 : i32
    %c0_i32_0 = arith.constant 0 : i32
    %c0_i32_1 = arith.constant 0 : i32
    return %c0_i32, %c0_i32_0 : i32, i32
  }
  func.func @transform_7(%arg0: i32) -> (i32, i32) {
    %c0_i32 = arith.constant 0 : i32
    %c0_i32_0 = arith.constant 0 : i32
    return %arg0, %c0_i32 : i32, i32
  }
}

</mosaic_0001>

<llo_original>
// kernel: dqn_forward.1
$region0: #{dqn_forward.1}
  #allocation0 [shape = 'u32[]', space=smem, size = 0x4, offset = 0x4, fixed_abs, tag = 'smem constant byte address 0x4 - core index']
  #allocation1 [shape = 'u32[144,128]{1,0:T(1,128)}', space=vmem, size = 0x12000, scoped, tag = 'internal scratch']
  %s0 = inlined_call_operand.vmem [shape: f32[16,16], index: 0, kind: input, shape index: {}]
  %s1 = inlined_call_operand.vmem [shape: f32[16,128], index: 1, kind: input, shape index: {}]
  %s2 = inlined_call_operand.vmem [shape: f32[1,128], index: 2, kind: input, shape index: {}]
  %s3 = inlined_call_operand.vmem [shape: f32[128,128], index: 3, kind: input, shape index: {}]
  %s4 = inlined_call_operand.vmem [shape: f32[1,128], index: 4, kind: input, shape index: {}]
  %s5 = inlined_call_operand.vmem [shape: f32[128,8], index: 5, kind: input, shape index: {}]
  %s6 = inlined_call_operand.vmem [shape: f32[1,8], index: 6, kind: input, shape index: {}]
  %s7 = inlined_call_operand.vmem [shape: f32[16,8], index: 7, kind: output, shape index: {}]
  %s8 = sld [smem:[#allocation0]]
  $region61: #{dqn_forward.1} parent=0
    _
  %s10 = ssub.s32 1, %s8
  %s11 = scalar_select 0, %s10, %s8
  loop: start=0, step=1, limit=4
  $region2: #{dqn_forward.1} parent=0 // loop_pre_header
    _
  $region3: #{dqn_forward.1} parent=0 // loop_header
    %s13 = sphi 0, %s17
    %p14 = scmp.ge.s32.totalorder %s13, 4
    %s23 = sphi 0, %s25
    %s26 = sphi 0, %s23
    %s27 = sphi 0, %s26
    %s43 = sphi 0, %s27
    %s47 = sphi 0, %s47
    %s49 = sphi 0, %s47
    %s50 = sphi 0, %s49
    %s64 = sphi 0, %s50
    %s68 = sphi 0, %s68
    %s70 = sphi 0, %s68
    %s71 = sphi 0, %s70
    %s85 = sphi 0, %s71
    %s89 = sphi 0, %s89
    %s91 = sphi 0, %s89
    %s92 = sphi 0, %s91
    %s106 = sphi 0, %s92
    %s110 = sphi 0, %s110
    %s112 = sphi 0, %s110
    %s113 = sphi 0, %s112
    %s127 = sphi 0, %s113
    %s131 = sphi 0, %s131
    %s133 = sphi 0, %s131
    %s134 = sphi 0, %s133
    %s148 = sphi 0, %s134
    %s152 = sphi 0, %s152
    %s154 = sphi 0, %s152
    %s155 = sphi 0, %s154
    %s169 = sphi 0, %s155
    %s175 = sphi 0, %s177
    %s178 = sphi 0, %s175
    %s179 = sphi 0, %s178
    %s195 = sphi 0, %s179
  $region4: #{dqn_forward.1} parent=0 // loop_header_branch
    %16 = sbr.rel (%p14) target = $region8
  $region5: #{dqn_forward.1} parent=0 // loop_body
    %s18 = ssub.s32 %s13, 1
    %s19 = ssub.s32 %s13, 2
    %s20 = sadd.s32 %s13, 1
    %s21 = ssub.s32 %s13, %s20
    %p22 = scmp.eq.s32.totalorder %s21, 0
    %s24 = sadd.s32 %s23, 1
    %s25 = scalar_select %p22, %s23, %s24
    %p28 = pneg %p22
    %p29 = scmp.eq.s32.totalorder %s13, 1
    %p30 = por %p28, %p29
    %p31 = scmp.ne.s32.totalorder %s23, %s26
    %p32 = scmp.eq.s32.totalorder %s13, 0
    %p33 = por %p31, %p32
    %p34 = scmp.ne.s32.totalorder %s23, %s26
    %p35 = scmp.eq.s32.totalorder %s18, 1
    %p36 = por %p34, %p35
    %p37 = scmp.ne.s32.totalorder %s26, %s27
    %p38 = scmp.eq.s32.totalorder %s18, 0
    %p39 = por %p37, %p38
    %p40 = scmp.ne.s32.totalorder %s26, %s27
    %p41 = scmp.eq.s32.totalorder %s19, 1
    %p42 = por %p40, %p41
    %p44 = scmp.ne.s32.totalorder %s27, %s43
    %p45 = scmp.eq.s32.totalorder %s19, 0
    %p46 = por %p44, %p45
    %s48 = sadd.s32 %s47, 1
    %p51 = scmp.eq.s32.totalorder %s13, 1
    %p52 = scmp.ne.s32.totalorder %s47, %s49
    %p53 = scmp.eq.s32.totalorder %s13, 0
    %p54 = por %p52, %p53
    %p55 = scmp.ne.s32.totalorder %s47, %s49
    %p56 = scmp.eq.s32.totalorder %s18, 1
    %p57 = por %p55, %p56
    %p58 = scmp.ne.s32.totalorder %s49, %s50
    %p59 = scmp.eq.s32.totalorder %s18, 0
    %p60 = por %p58, %p59
    %p61 = scmp.ne.s32.totalorder %s49, %s50
    %p62 = scmp.eq.s32.totalorder %s19, 1
    %p63 = por %p61, %p62
    %p65 = scmp.ne.s32.totalorder %s50, %s64
    %p66 = scmp.eq.s32.totalorder %s19, 0
    %p67 = por %p65, %p66
    %s69 = sadd.s32 %s68, 1
    %p72 = scmp.eq.s32.totalorder %s13, 1
    %p73 = scmp.ne.s32.totalorder %s68, %s70
    %p74 = scmp.eq.s32.totalorder %s13, 0
    %p75 = por %p73, %p74
    %p76 = scmp.ne.s32.totalorder %s68, %s70
    %p77 = scmp.eq.s32.totalorder %s18, 1
    %p78 = por %p76, %p77
    %p79 = scmp.ne.s32.totalorder %s70, %s71
    %p80 = scmp.eq.s32.totalorder %s18, 0
    %p81 = por %p79, %p80
    %p82 = scmp.ne.s32.totalorder %s70, %s71
    %p83 = scmp.eq.s32.totalorder %s19, 1
    %p84 = por %p82, %p83
    %p86 = scmp.ne.s32.totalorder %s71, %s85
    %p87 = scmp.eq.s32.totalorder %s19, 0
    %p88 = por %p86, %p87
    %s90 = sadd.s32 %s89, 1
    %p93 = scmp.eq.s32.totalorder %s13, 1
    %p94 = scmp.ne.s32.totalorder %s89, %s91
    %p95 = scmp.eq.s32.totalorder %s13, 0
    %p96 = por %p94, %p95
    %p97 = scmp.ne.s32.totalorder %s89, %s91
    %p98 = scmp.eq.s32.totalorder %s18, 1
    %p99 = por %p97, %p98
    %p100 = scmp.ne.s32.totalorder %s91, %s92
    %p101 = scmp.eq.s32.totalorder %s18, 0
    %p102 = por %p100, %p101
    %p103 = scmp.ne.s32.totalorder %s91, %s92
    %p104 = scmp.eq.s32.totalorder %s19, 1
    %p105 = por %p103, %p104
    %p107 = scmp.ne.s32.totalorder %s92, %s106
    %p108 = scmp.eq.s32.totalorder %s19, 0
    %p109 = por %p107, %p108
    %s111 = sadd.s32 %s110, 1
    %p114 = scmp.eq.s32.totalorder %s13, 1
    %p115 = scmp.ne.s32.totalorder %s110, %s112
    %p116 = scmp.eq.s32.totalorder %s13, 0
    %p117 = por %p115, %p116
    %p118 = scmp.ne.s32.totalorder %s110, %s112
    %p119 = scmp.eq.s32.totalorder %s18, 1
    %p120 = por %p118, %p119
    %p121 = scmp.ne.s32.totalorder %s112, %s113
    %p122 = scmp.eq.s32.totalorder %s18, 0
    %p123 = por %p121, %p122
    %p124 = scmp.ne.s32.totalorder %s112, %s113
    %p125 = scmp.eq.s32.totalorder %s19, 1
    %p126 = por %p124, %p125
    %p128 = scmp.ne.s32.totalorder %s113, %s127
    %p129 = scmp.eq.s32.totalorder %s19, 0
    %p130 = por %p128, %p129
    %s132 = sadd.s32 %s131, 1
    %p135 = scmp.eq.s32.totalorder %s13, 1
    %p136 = scmp.ne.s32.totalorder %s131, %s133
    %p137 = scmp.eq.s32.totalorder %s13, 0
    %p138 = por %p136, %p137
    %p139 = scmp.ne.s32.totalorder %s131, %s133
    %p140 = scmp.eq.s32.totalorder %s18, 1
    %p141 = por %p139, %p140
    %p142 = scmp.ne.s32.totalorder %s133, %s134
    %p143 = scmp.eq.s32.totalorder %s18, 0
    %p144 = por %p142, %p143
    %p145 = scmp.ne.s32.totalorder %s133, %s134
    %p146 = scmp.eq.s32.totalorder %s19, 1
    %p147 = por %p145, %p146
    %p149 = scmp.ne.s32.totalorder %s134, %s148
    %p150 = scmp.eq.s32.totalorder %s19, 0
    %p151 = por %p149, %p150
    %s153 = sadd.s32 %s152, 1
    %p156 = scmp.eq.s32.totalorder %s13, 1
    %p157 = scmp.ne.s32.totalorder %s152, %s154
    %p158 = scmp.eq.s32.totalorder %s13, 0
    %p159 = por %p157, %p158
    %p160 = scmp.ne.s32.totalorder %s152, %s154
    %p161 = scmp.eq.s32.totalorder %s18, 1
    %p162 = por %p160, %p161
    %p163 = scmp.ne.s32.totalorder %s154, %s155
    %p164 = scmp.eq.s32.totalorder %s18, 0
    %p165 = por %p163, %p164
    %p166 = scmp.ne.s32.totalorder %s154, %s155
    %p167 = scmp.eq.s32.totalorder %s19, 1
    %p168 = por %p166, %p167
    %p170 = scmp.ne.s32.totalorder %s155, %s169
    %p171 = scmp.eq.s32.totalorder %s19, 0
    %p172 = por %p170, %p171
    %s173 = ssub.s32 %s13, %s20
    %p174 = scmp.eq.s32.totalorder %s173, 0
    %s176 = sadd.s32 %s175, 1
    %s177 = scalar_select %p174, %s175, %s176
    %p180 = pneg %p174
    %p181 = scmp.eq.s32.totalorder %s13, 1
    %p182 = por %p180, %p181
    %p183 = scmp.ne.s32.totalorder %s175, %s178
    %p184 = scmp.eq.s32.totalorder %s13, 0
    %p185 = por %p183, %p184
    %p186 = scmp.ne.s32.totalorder %s175, %s178
    %p187 = scmp.eq.s32.totalorder %s18, 1
    %p188 = por %p186, %p187
    %p189 = scmp.ne.s32.totalorder %s178, %s179
    %p190 = scmp.eq.s32.totalorder %s18, 0
    %p191 = por %p189, %p190
    %p192 = scmp.ne.s32.totalorder %s178, %s179
    %p193 = scmp.eq.s32.totalorder %s19, 1
    %p194 = por %p192, %p193
    %p196 = scmp.ne.s32.totalorder %s179, %s195
    %p197 = scmp.eq.s32.totalorder %s19, 0
    %p198 = por %p196, %p197
    %p199 = scmp.le.s32.totalorder 1, %s13
    %p200 = scmp.lt.s32.totalorder %s13, 3
    %p201 = pnand %p199, %p200
    %p202 = pneg %p201
    // Predicated region
    $region9: #{dqn_forward.1} parent=5 // pred_check
      _
    $region10: #{dqn_forward.1} parent=5 // pred_check_branch
      %204 = sbr.rel (%p201) target = $region12
    $region11: #{dqn_forward.1} parent=5 // pred_region
      %s205 = ssub.s32 %s13, 1
      // Predicated region
      $region13: #{dqn_forward.1} parent=11 // pred_check
        %p206 = pneg %p60
      $region14: #{dqn_forward.1} parent=11 // pred_check_branch
        %208 = sbr.rel (%p206) target = $region16
      $region15: #{dqn_forward.1} parent=11 // pred_region
        _
      $region16: #{dqn_forward.1} parent=11 // pred_fallthru
        _
      // Predicated region
      $region17: #{dqn_forward.1} parent=11 // pred_check
        %p209 = pneg %p81
      $region18: #{dqn_forward.1} parent=11 // pred_check_branch
        %211 = sbr.rel (%p209) target = $region20
      $region19: #{dqn_forward.1} parent=11 // pred_region
        _
      $region20: #{dqn_forward.1} parent=11 // pred_fallthru
        _
      // Predicated region
      $region21: #{dqn_forward.1} parent=11 // pred_check
        %p212 = pneg %p102
      $region22: #{dqn_forward.1} parent=11 // pred_check_branch
        %214 = sbr.rel (%p212) target = $region24
      $region23: #{dqn_forward.1} parent=11 // pred_region
        _
      $region24: #{dqn_forward.1} parent=11 // pred_fallthru
        _
      // Predicated region
      $region25: #{dqn_forward.1} parent=11 // pred_check
        %p215 = pneg %p123
      $region26: #{dqn_forward.1} parent=11 // pred_check_branch
        %217 = sbr.rel (%p215) target = $region28
      $region27: #{dqn_forward.1} parent=11 // pred_region
        _
      $region28: #{dqn_forward.1} parent=11 // pred_fallthru
        _
      // Predicated region
      $region29: #{dqn_forward.1} parent=11 // pred_check
        %p218 = pneg %p144
      $region30: #{dqn_forward.1} parent=11 // pred_check_branch
        %220 = sbr.rel (%p218) target = $region32
      $region31: #{dqn_forward.1} parent=11 // pred_region
        _
      $region32: #{dqn_forward.1} parent=11 // pred_fallthru
        _
      // Predicated region
      $region33: #{dqn_forward.1} parent=11 // pred_check
        %p221 = pneg %p165
      $region34: #{dqn_forward.1} parent=11 // pred_check_branch
        %223 = sbr.rel (%p221) target = $region36
      $region35: #{dqn_forward.1} parent=11 // pred_region
        _
      $region36: #{dqn_forward.1} parent=11 // pred_fallthru
        _
    $region12: #{dqn_forward.1} parent=5 // pred_fallthru
      _
    %p224 = scmp.lt.s32.totalorder %s13, 2
    // Predicated region
    $region37: #{dqn_forward.1} parent=5 // pred_check
      %p225 = pneg %p224
    $region38: #{dqn_forward.1} parent=5 // pred_check_branch
      %227 = sbr.rel (%p225) target = $region40
    $region39: #{dqn_forward.1} parent=5 // pred_region
      // Predicated region
      $region41: #{dqn_forward.1} parent=39 // pred_check
        %p228 = pneg %p33
      $region42: #{dqn_forward.1} parent=39 // pred_check_branch
        %230 = sbr.rel (%p228) target = $region44
      $region43: #{dqn_forward.1} parent=39 // pred_region
        %p231 = scmp.lt.s32.totalorder %s13, 1
        %s232 = scalar_select %p231, %s13, 1
        %s233 = smul.addr %s232, 8
        %s234 = scalar_lea.vmem %s0, %s233
      $region44: #{dqn_forward.1} parent=39 // pred_fallthru
        _
    $region40: #{dqn_forward.1} parent=5 // pred_fallthru
      _
    %p235 = scmp.le.s32.totalorder 1, %s13
    %p236 = scmp.lt.s32.totalorder %s13, 3
    %p237 = pnand %p235, %p236
    %p238 = pneg %p237
    // Predicated region
    $region45: #{dqn_forward.1} parent=5 // pred_check
      _
    $region46: #{dqn_forward.1} parent=5 // pred_check_branch
      %240 = sbr.rel (%p237) target = $region48
    $region47: #{dqn_forward.1} parent=5 // pred_region
      %s241 = ssub.s32 %s13, 1
      %p242 = scmp.lt.s32.totalorder %s18, 1
      %s243 = scalar_select %p242, %s18, 1
      %s244 = smul.addr %s243, 8
      %s245 = scalar_lea.vmem %s0, %s244
      %p246 = pneg %p39
      %p247 = pneg %p36
      %p248 = pneg %p60
      %p249 = pneg %p57
      %p250 = pneg %p81
      %p251 = pneg %p78
      %p252 = pneg %p102
      %p253 = pneg %p99
      %p254 = pneg %p123
      %p255 = pneg %p120
      %p256 = pneg %p144
      %p257 = pneg %p141
      %p258 = pneg %p165
      %p259 = pneg %p162
      %p260 = pneg %p191
      %p261 = pneg %p188
      %p262 = scmp.lt.s32.totalorder %s18, 1
      %s263 = scalar_select %p262, %s18, 1
      %s264 = smul.addr %s263, 8
      %s265 = scalar_lea.vmem %s7, %s264
      %p266 = scmp.lt.s32.totalorder %s18, 1
      %s267 = scalar_select %p266, %s18, 1
      %s268 = smul.addr %s267, 8
      %s269 = scalar_lea.vmem %s0, %s268
      %p270 = scmp.lt.s32.totalorder %s18, 1
      %s271 = scalar_select %p270, %s18, 1
      %s272 = smul.addr %s271, 8
      %s273 = scalar_lea.vmem %s7, %s272
      %v274 = vld [vmem:[%s269] sm:$0xff]
      %v275 = vld [vmem:[%s1] sm:$0xff]
      %v276 = vld [vmem:[%s1 + $0x8] sm:$0xff]
      %v277 = vld [vmem:[%s2] sm:$0x1]
      %v279 = vlaneseq
      %v280 = vshrl.u32 %v279, 7
      %v281 = vsub.s32 0, %v280
      %v282 = vrot.slane %v277, %v281
      %vm284 = vcmask 130048
      %v286 = vsel %vm284, %v274, 0
      %288 = vmatprep.subr.mxu0 0.0
      %v289 = vand.u32 %v275, 4294901760
      %290 = vmatpush1.msra.mxu0 %v289
      %291 = vmatprep.subr.mxu0 0.0
      %v292 = vand.u32 %v276, 4294901760
      %293 = vmatpush1.msra.mxu0 %v292
      %294 = vmatprep.subr.mxu0 0.0
      %295 = vmatpush1.msra.mxu0 0.0
      %296 = vmatprep.subr.mxu0 0.0
      %297 = vmatpush1.msra.mxu0 0.0
      %298 = vmatprep.subr.mxu0 0.0
      %299 = vmatpush1.msra.mxu0 0.0
      %300 = vmatprep.subr.mxu0 0.0
      %301 = vmatpush1.msra.mxu0 0.0
      %302 = vmatprep.subr.mxu0 0.0
      %303 = vmatpush1.msra.mxu0 0.0
      %304 = vmatprep.subr.mxu0 0.0
      %305 = vmatpush1.msra.mxu0 0.0
      %306 = vmatprep.subr.mxu0 0.0
      %307 = vmatpush1.msra.mxu0 0.0
      %308 = vmatprep.subr.mxu0 0.0
      %309 = vmatpush1.msra.mxu0 0.0
      %310 = vmatprep.subr.mxu0 0.0
      %311 = vmatpush1.msra.mxu0 0.0
      %312 = vmatprep.subr.mxu0 0.0
      %313 = vmatpush1.msra.mxu0 0.0
      %314 = vmatprep.subr.mxu0 0.0
      %315 = vmatpush1.msra.mxu0 0.0
      %316 = vmatprep.subr.mxu0 0.0
      %317 = vmatpush1.msra.mxu0 0.0
      %318 = vmatprep.subr.mxu0 0.0
      %319 = vmatpush1.msra.mxu0 0.0
      %320 = vmatprep.subr.mxu0 0.0
      %321 = vmatpush1.msra.mxu0 0.0
      %322 = vmatprep.subr.mxu0 0.0
      %323 = vmatpush1.msra.mxu0 0.0
      %324 = vmatprep.subr.mxu0 0.0
      %325 = vmatpush1.msra.mxu0 0.0
      %326 = vmatprep.subr.mxu0 0.0
      %327 = vmatpush1.msra.mxu0 0.0
      %328 = vmatprep.subr.mxu0 0.0
      %329 = vmatpush1.msra.mxu0 0.0
      %330 = vmatprep.subr.mxu0 0.0
      %331 = vmatpush1.msra.mxu0 0.0
      %332 = vmatprep.subr.mxu0 0.0
      %333 = vmatpush1.msra.mxu0 0.0
      %334 = vmatprep.subr.mxu0 0.0
      %335 = vmatpush1.msra.mxu0 0.0
      %336 = vmatprep.subr.mxu0 0.0
      %337 = vmatpush1.msra.mxu0 0.0
      %338 = vmatprep.subr.mxu0 0.0
      %339 = vmatpush1.msra.mxu0 0.0
      %340 = vmatprep.subr.mxu0 0.0
      %341 = vmatpush1.msra.mxu0 0.0
      %342 = vmatprep.subr.mxu0 0.0
      %343 = vmatpush1.msra.mxu0 0.0
      %344 = vmatprep.subr.mxu0 0.0
      %345 = vmatpush1.msra.mxu0 0.0
      %346 = vmatprep.subr.mxu0 0.0
      %347 = vmatpush1.msra.mxu0 0.0
      %348 = vmatprep.subr.mxu0 0.0
      %349 = vmatpush1.msra.mxu0 0.0
      %350 = vmatprep.subr.mxu0 0.0
      %351 = vmatpush1.msra.mxu0 0.0
      %352 = vmatprep.subr.mxu0 0.0
      %353 = vmatpush1.msra.mxu0 0.0
      %354 = vmatprep.mubr.f32.mxu0 0.0
      %v355 = vand.u32 %v286, 4294901760
      %v356 = vsub.f32 %v286, %v355
      %v357 = vand.u32 %v356, 4294901760
      %v358 = vsub.f32 %v356, %v357
      %v359 = vand.u32 %v358, 4294901760
      %360 = vmatmul.mubr.f32.gmra.mrb[0].mxu0 %v359
      %v361 = vpop.f32.mrb[0].mxu0
      %v362 = vadd.f32 %v282, %v361
      %v363 = vpop.f32.mrb[0].mxu0
      %364 = vdwg.mxu0
      %365 = vmatprep.subr.mxu0 0.0
      %v366 = vand.u32 %v275, 4294901760
      %v367 = vsub.f32 %v275, %v366
      %v368 = vand.u32 %v367, 4294901760
      %v369 = vsub.f32 %v367, %v368
      %v370 = vand.u32 %v369, 4294901760
      %371 = vmatpush1.msra.mxu0 %v370
      %372 = vmatprep.subr.mxu0 0.0
      %v373 = vand.u32 %v276, 4294901760
      %v374 = vsub.f32 %v276, %v373
      %v375 = vand.u32 %v374, 4294901760
      %v376 = vsub.f32 %v374, %v375
      %v377 = vand.u32 %v376, 4294901760
      %378 = vmatpush1.msra.mxu0 %v377
      %379 = vmatprep.subr.mxu0 0.0
      %380 = vmatpush1.msra.mxu0 0.0
      %381 = vmatprep.subr.mxu0 0.0
      %382 = vmatpush1.msra.mxu0 0.0
      %383 = vmatprep.subr.mxu0 0.0
      %384 = vmatpush1.msra.mxu0 0.0
      %385 = vmatprep.subr.mxu0 0.0
      %386 = vmatpush1.msra.mxu0 0.0
      %387 = vmatprep.subr.mxu0 0.0
      %388 = vmatpush1.msra.mxu0 0.0
      %389 = vmatprep.subr.mxu0 0.0
      %390 = vmatpush1.msra.mxu0 0.0
      %391 = vmatprep.subr.mxu0 0.0
      %392 = vmatpush1.msra.mxu0 0.0
      %393 = vmatprep.subr.mxu0 0.0
      %394 = vmatpush1.msra.mxu0 0.0
      %395 = vmatprep.subr.mxu0 0.0
      %396 = vmatpush1.msra.mxu0 0.0
      %397 = vmatprep.subr.mxu0 0.0
      %398 = vmatpush1.msra.mxu0 0.0
      %399 = vmatprep.subr.mxu0 0.0
      %400 = vmatpush1.msra.mxu0 0.0
      %401 = vmatprep.subr.mxu0 0.0
      %402 = vmatpush1.msra.mxu0 0.0
      %403 = vmatprep.subr.mxu0 0.0
      %404 = vmatpush1.msra.mxu0 0.0
      %405 = vmatprep.subr.mxu0 0.0
      %406 = vmatpush1.msra.mxu0 0.0
      %407 = vmatprep.subr.mxu0 0.0
      %408 = vmatpush1.msra.mxu0 0.0
      %409 = vmatprep.subr.mxu0 0.0
      %410 = vmatpush1.msra.mxu0 0.0
      %411 = vmatprep.subr.mxu0 0.0
      %412 = vmatpush1.msra.mxu0 0.0
      %413 = vmatprep.subr.mxu0 0.0
      %414 = vmatpush1.msra.mxu0 0.0
      %415 = vmatprep.subr.mxu0 0.0
      %416 = vmatpush1.msra.mxu0 0.0
      %417 = vmatprep.subr.mxu0 0.0
      %418 = vmatpush1.msra.mxu0 0.0
      %419 = vmatprep.subr.mxu0 0.0
      %420 = vmatpush1.msra.mxu0 0.0
      %421 = vmatprep.subr.mxu0 0.0
      %422 = vmatpush1.msra.mxu0 0.0
      %423 = vmatprep.subr.mxu0 0.0
      %424 = vmatpush1.msra.mxu0 0.0
      %425 = vmatprep.subr.mxu0 0.0
      %426 = vmatpush1.msra.mxu0 0.0
      %427 = vmatprep.subr.mxu0 0.0
      %428 = vmatpush1.msra.mxu0 0.0
      %429 = vmatprep.subr.mxu0 0.0
      %430 = vmatpush1.msra.mxu0 0.0
      %431 = vmatprep.subr.mxu0 0.0
      %432 = vmatpush1.msra.mxu0 0.0
      %433 = vmatprep.subr.mxu0 0.0
      %434 = vmatpush1.msra.mxu0 0.0
      %435 = vmatprep.subr.mxu0 0.0
      %436 = vmatpush1.msra.mxu0 0.0
      %437 = vmatprep.subr.mxu0 0.0
      %438 = vmatpush1.msra.mxu0 0.0
      %439 = vmatprep.mubr.f32.mxu0 0.0
      %v440 = vand.u32 %v286, 4294901760
      %441 = vmatmul.mubr.f32.gmra.mrb[0].mxu0 %v440
      %v442 = vpop.f32.mrb[0].mxu0
      %v443 = vadd.f32 %v362, %v442
      %v444 = vpop.f32.mrb[0].mxu0
      %445 = vdwg.mxu0
      %446 = vmatprep.subr.mxu0 0.0
      %v447 = vand.u32 %v275, 4294901760
      %v448 = vsub.f32 %v275, %v447
      %449 = vmatpush1.msra.mxu0 %v448
      %450 = vmatprep.subr.mxu0 0.0
      %v451 = vand.u32 %v276, 4294901760
      %v452 = vsub.f32 %v276, %v451
      %453 = vmatpush1.msra.mxu0 %v452
      %454 = vmatprep.subr.mxu0 0.0
      %455 = vmatpush1.msra.mxu0 0.0
      %456 = vmatprep.subr.mxu0 0.0
      %457 = vmatpush1.msra.mxu0 0.0
      %458 = vmatprep.subr.mxu0 0.0
      %459 = vmatpush1.msra.mxu0 0.0
      %460 = vmatprep.subr.mxu0 0.0
      %461 = vmatpush1.msra.mxu0 0.0
      %462 = vmatprep.subr.mxu0 0.0
      %463 = vmatpush1.msra.mxu0 0.0
      %464 = vmatprep.subr.mxu0 0.0
      %465 = vmatpush1.msra.mxu0 0.0
      %466 = vmatprep.subr.mxu0 0.0
      %467 = vmatpush1.msra.mxu0 0.0
      %468 = vmatprep.subr.mxu0 0.0
      %469 = vmatpush1.msra.mxu0 0.0
      %470 = vmatprep.subr.mxu0 0.0
      %471 = vmatpush1.msra.mxu0 0.0
      %472 = vmatprep.subr.mxu0 0.0
      %473 = vmatpush1.msra.mxu0 0.0
      %474 = vmatprep.subr.mxu0 0.0
      %475 = vmatpush1.msra.mxu0 0.0
      %476 = vmatprep.subr.mxu0 0.0
      %477 = vmatpush1.msra.mxu0 0.0
      %478 = vmatprep.subr.mxu0 0.0
      %479 = vmatpush1.msra.mxu0 0.0
      %480 = vmatprep.subr.mxu0 0.0
      %481 = vmatpush1.msra.mxu0 0.0
      %482 = vmatprep.subr.mxu0 0.0
      %483 = vmatpush1.msra.mxu0 0.0
      %484 = vmatprep.subr.mxu0 0.0
      %485 = vmatpush1.msra.mxu0 0.0
      %486 = vmatprep.subr.mxu0 0.0
      %487 = vmatpush1.msra.mxu0 0.0
      %488 = vmatprep.subr.mxu0 0.0
      %489 = vmatpush1.msra.mxu0 0.0
      %490 = vmatprep.subr.mxu0 0.0
      %491 = vmatpush1.msra.mxu0 0.0
      %492 = vmatprep.subr.mxu0 0.0
      %493 = vmatpush1.msra.mxu0 0.0
      %494 = vmatprep.subr.mxu0 0.0
      %495 = vmatpush1.msra.mxu0 0.0
      %496 = vmatprep.subr.mxu0 0.0
      %497 = vmatpush1.msra.mxu0 0.0
      %498 = vmatprep.subr.mxu0 0.0
      %499 = vmatpush1.msra.mxu0 0.0
      %500 = vmatprep.subr.mxu0 0.0
      %501 = vmatpush1.msra.mxu0 0.0
      %502 = vmatprep.subr.mxu0 0.0
      %503 = vmatpush1.msra.mxu0 0.0
      %504 = vmatprep.subr.mxu0 0.0
      %505 = vmatpush1.msra.mxu0 0.0
      %506 = vmatprep.subr.mxu0 0.0
      %507 = vmatpush1.msra.mxu0 0.0
      %508 = vmatprep.subr.mxu0 0.0
      %509 = vmatpush1.msra.mxu0 0.0
      %510 = vmatprep.subr.mxu0 0.0
      %511 = vmatpush1.msra.mxu0 0.0
      %512 = vmatprep.subr.mxu0 0.0
      %513 = vmatpush1.msra.mxu0 0.0
      %514 = vmatprep.mubr.f32.mxu0 0.0
      %v515 = vand.u32 %v286, 4294901760
      %v516 = vsub.f32 %v286, %v515
      %517 = vmatmul.mubr.f32.gmra.mrb[0].mxu0 %v516
      %v518 = vpop.f32.mrb[0].mxu0
      %v519 = vadd.f32 %v443, %v518
      %v520 = vpop.f32.mrb[0].mxu0
      %521 = vdwg.mxu0
      %522 = vmatprep.subr.mxu0 0.0
      %v523 = vand.u32 %v275, 4294901760
      %524 = vmatpush1.msra.mxu0 %v523
      %525 = vmatprep.subr.mxu0 0.0
      %v526 = vand.u32 %v276, 4294901760
      %527 = vmatpush1.msra.mxu0 %v526
      %528 = vmatprep.subr.mxu0 0.0
      %529 = vmatpush1.msra.mxu0 0.0
      %530 = vmatprep.subr.mxu0 0.0
      %531 = vmatpush1.msra.mxu0 0.0
      %532 = vmatprep.subr.mxu0 0.0
      %533 = vmatpush1.msra.mxu0 0.0
      %534 = vmatprep.subr.mxu0 0.0
      %535 = vmatpush1.msra.mxu0 0.0
      %536 = vmatprep.subr.mxu0 0.0
      %537 = vmatpush1.msra.mxu0 0.0
      %538 = vmatprep.subr.mxu0 0.0
      %539 = vmatpush1.msra.mxu0 0.0
      %540 = vmatprep.subr.mxu0 0.0
      %541 = vmatpush1.msra.mxu0 0.0
      %542 = vmatprep.subr.mxu0 0.0
      %543 = vmatpush1.msra.mxu0 0.0
      %544 = vmatprep.subr.mxu0 0.0
      %545 = vmatpush1.msra.mxu0 0.0
      %546 = vmatprep.subr.mxu0 0.0
      %547 = vmatpush1.msra.mxu0 0.0
      %548 = vmatprep.subr.mxu0 0.0
      %549 = vmatpush1.msra.mxu0 0.0
      %550 = vmatprep.subr.mxu0 0.0
      %551 = vmatpush1.msra.mxu0 0.0
      %552 = vmatprep.subr.mxu0 0.0
      %553 = vmatpush1.msra.mxu0 0.0
      %554 = vmatprep.subr.mxu0 0.0
      %555 = vmatpush1.msra.mxu0 0.0
      %556 = vmatprep.subr.mxu0 0.0
      %557 = vmatpush1.msra.mxu0 0.0
      %558 = vmatprep.subr.mxu0 0.0
      %559 = vmatpush1.msra.mxu0 0.0
      %560 = vmatprep.subr.mxu0 0.0
      %561 = vmatpush1.msra.mxu0 0.0
      %562 = vmatprep.subr.mxu0 0.0
      %563 = vmatpush1.msra.mxu0 0.0
      %564 = vmatprep.subr.mxu0 0.0
      %565 = vmatpush1.msra.mxu0 0.0
      %566 = vmatprep.subr.mxu0 0.0
      %567 = vmatpush1.msra.mxu0 0.0
      %568 = vmatprep.subr.mxu0 0.0
      %569 = vmatpush1.msra.mxu0 0.0
      %570 = vmatprep.subr.mxu0 0.0
      %571 = vmatpush1.msra.mxu0 0.0
      %572 = vmatprep.subr.mxu0 0.0
      %573 = vmatpush1.msra.mxu0 0.0
      %574 = vmatprep.subr.mxu0 0.0
      %575 = vmatpush1.msra.mxu0 0.0
      %576 = vmatprep.subr.mxu0 0.0
      %577 = vmatpush1.msra.mxu0 0.0
      %578 = vmatprep.subr.mxu0 0.0
      %579 = vmatpush1.msra.mxu0 0.0
      %580 = vmatprep.subr.mxu0 0.0
      %581 = vmatpush1.msra.mxu0 0.0
      %582 = vmatprep.subr.mxu0 0.0
      %583 = vmatpush1.msra.mxu0 0.0
      %584 = vmatprep.subr.mxu0 0.0
      %585 = vmatpush1.msra.mxu0 0.0
      %586 = vmatprep.subr.mxu0 0.0
      %587 = vmatpush1.msra.mxu0 0.0
      %588 = vmatprep.mubr.f32.mxu0 0.0
      %v589 = vand.u32 %v286, 4294901760
      %v590 = vsub.f32 %v286, %v589
      %v591 = vand.u32 %v590, 4294901760
      %592 = vmatmul.mubr.f32.gmra.mrb[0].mxu0 %v591
      %v593 = vpop.f32.mrb[0].mxu0
      %v594 = vadd.f32 %v519, %v593
      %v595 = vpop.f32.mrb[0].mxu0
      %596 = vdwg.mxu0
      %597 = vmatprep.subr.mxu0 0.0
      %v598 = vand.u32 %v275, 4294901760
      %v599 = vsub.f32 %v275, %v598
      %v600 = vand.u32 %v599, 4294901760
      %601 = vmatpush1.msra.mxu0 %v600
      %602 = vmatprep.subr.mxu0 0.0
      %v603 = vand.u32 %v276, 4294901760
      %v604 = vsub.f32 %v276, %v603
      %v605 = vand.u32 %v604, 4294901760
      %606 = vmatpush1.msra.mxu0 %v605
      %607 = vmatprep.subr.mxu0 0.0
      %608 = vmatpush1.msra.mxu0 0.0
      %609 = vmatprep.subr.mxu0 0.0
      %610 = vmatpush1.msra.mxu0 0.0
      %611 = vmatprep.subr.mxu0 0.0
      %612 = vmatpush1.msra.mxu0 0.0
      %613 = vmatprep.subr.mxu0 0.0
      %614 = vmatpush1.msra.mxu0 0.0
      %615 = vmatprep.subr.mxu0 0.0
      %616 = vmatpush1.msra.mxu0 0.0
      %617 = vmatprep.subr.mxu0 0.0
      %618 = vmatpush1.msra.mxu0 0.0
      %619 = vmatprep.subr.mxu0 0.0
      %620 = vmatpush1.msra.mxu0 0.0
      %621 = vmatprep.subr.mxu0 0.0
      %622 = vmatpush1.msra.mxu0 0.0
      %623 = vmatprep.subr.mxu0 0.0
      %624 = vmatpush1.msra.mxu0 0.0
      %625 = vmatprep.subr.mxu0 0.0
      %626 = vmatpush1.msra.mxu0 0.0
      %627 = vmatprep.subr.mxu0 0.0
      %628 = vmatpush1.msra.mxu0 0.0
      %629 = vmatprep.subr.mxu0 0.0
      %630 = vmatpush1.msra.mxu0 0.0
      %631 = vmatprep.subr.mxu0 0.0
      %632 = vmatpush1.msra.mxu0 0.0
      %633 = vmatprep.subr.mxu0 0.0
      %634 = vmatpush1.msra.mxu0 0.0
      %635 = vmatprep.subr.mxu0 0.0
      %636 = vmatpush1.msra.mxu0 0.0
      %637 = vmatprep.subr.mxu0 0.0
      %638 = vmatpush1.msra.mxu0 0.0
      %639 = vmatprep.subr.mxu0 0.0
      %640 = vmatpush1.msra.mxu0 0.0
      %641 = vmatprep.subr.mxu0 0.0
      %642 = vmatpush1.msra.mxu0 0.0
      %643 = vmatprep.subr.mxu0 0.0
      %644 = vmatpush1.msra.mxu0 0.0
      %645 = vmatprep.subr.mxu0 0.0
      %646 = vmatpush1.msra.mxu0 0.0
      %647 = vmatprep.subr.mxu0 0.0
      %648 = vmatpush1.msra.mxu0 0.0
      %649 = vmatprep.subr.mxu0 0.0
      %650 = vmatpush1.msra.mxu0 0.0
      %651 = vmatprep.subr.mxu0 0.0
      %652 = vmatpush1.msra.mxu0 0.0
      %653 = vmatprep.subr.mxu0 0.0
      %654 = vmatpush1.msra.mxu0 0.0
      %655 = vmatprep.subr.mxu0 0.0
      %656 = vmatpush1.msra.mxu0 0.0
      %657 = vmatprep.subr.mxu0 0.0
      %658 = vmatpush1.msra.mxu0 0.0
      %659 = vmatprep.subr.mxu0 0.0
      %660 = vmatpush1.msra.mxu0 0.0
      %661 = vmatprep.subr.mxu0 0.0
      %662 = vmatpush1.msra.mxu0 0.0
      %663 = vmatprep.subr.mxu0 0.0
      %664 = vmatpush1.msra.mxu0 0.0
      %665 = vmatprep.subr.mxu0 0.0
      %666 = vmatpush1.msra.mxu0 0.0
      %667 = vmatprep.mubr.f32.mxu0 0.0
      %v668 = vand.u32 %v286, 4294901760
      %669 = vmatmul.mubr.f32.gmra.mrb[0].mxu0 %v668
      %v670 = vpop.f32.mrb[0].mxu0
      %v671 = vadd.f32 %v594, %v670
      %v672 = vpop.f32.mrb[0].mxu0
      %673 = vdwg.mxu0
      %674 = vmatprep.subr.mxu0 0.0
      %v675 = vand.u32 %v275, 4294901760
      %676 = vmatpush1.msra.mxu0 %v675
      %677 = vmatprep.subr.mxu0 0.0
      %v678 = vand.u32 %v276, 4294901760
      %679 = vmatpush1.msra.mxu0 %v678
      %680 = vmatprep.subr.mxu0 0.0
      %681 = vmatpush1.msra.mxu0 0.0
      %682 = vmatprep.subr.mxu0 0.0
      %683 = vmatpush1.msra.mxu0 0.0
      %684 = vmatprep.subr.mxu0 0.0
      %685 = vmatpush1.msra.mxu0 0.0
      %686 = vmatprep.subr.mxu0 0.0
      %687 = vmatpush1.msra.mxu0 0.0
      %688 = vmatprep.subr.mxu0 0.0
      %689 = vmatpush1.msra.mxu0 0.0
      %690 = vmatprep.subr.mxu0 0.0
      %691 = vmatpush1.msra.mxu0 0.0
      %692 = vmatprep.subr.mxu0 0.0
      %693 = vmatpush1.msra.mxu0 0.0
      %694 = vmatprep.subr.mxu0 0.0
      %695 = vmatpush1.msra.mxu0 0.0
      %696 = vmatprep.subr.mxu0 0.0
      %697 = vmatpush1.msra.mxu0 0.0
      %698 = vmatprep.subr.mxu0 0.0
      %699 = vmatpush1.msra.mxu0 0.0
      %700 = vmatprep.subr.mxu0 0.0
      %701 = vmatpush1.msra.mxu0 0.0
      %702 = vmatprep.subr.mxu0 0.0
      %703 = vmatpush1.msra.mxu0 0.0
      %704 = vmatprep.subr.mxu0 0.0
      %705 = vmatpush1.msra.mxu0 0.0
      %706 = vmatprep.subr.mxu0 0.0
      %707 = vmatpush1.msra.mxu0 0.0
      %708 = vmatprep.subr.mxu0 0.0
      %709 = vmatpush1.msra.mxu0 0.0
      %710 = vmatprep.subr.mxu0 0.0
      %711 = vmatpush1.msra.mxu0 0.0
      %712 = vmatprep.subr.mxu0 0.0
      %713 = vmatpush1.msra.mxu0 0.0
      %714 = vmatprep.subr.mxu0 0.0
      %715 = vmatpush1.msra.mxu0 0.0
      %716 = vmatprep.subr.mxu0 0.0
      %717 = vmatpush1.msra.mxu0 0.0
      %718 = vmatprep.subr.mxu0 0.0
      %719 = vmatpush1.msra.mxu0 0.0
      %720 = vmatprep.subr.mxu0 0.0
      %721 = vmatpush1.msra.mxu0 0.0
      %722 = vmatprep.subr.mxu0 0.0
      %723 = vmatpush1.msra.mxu0 0.0
      %724 = vmatprep.subr.mxu0 0.0
      %725 = vmatpush1.msra.mxu0 0.0
      %726 = vmatprep.subr.mxu0 0.0
      %727 = vmatpush1.msra.mxu0 0.0
      %728 = vmatprep.subr.mxu0 0.0
      %729 = vmatpush1.msra.mxu0 0.0
      %730 = vmatprep.subr.mxu0 0.0
      %731 = vmatpush1.msra.mxu0 0.0
      %732 = vmatprep.subr.mxu0 0.0
      %733 = vmatpush1.msra.mxu0 0.0
      %734 = vmatprep.subr.mxu0 0.0
      %735 = vmatpush1.msra.mxu0 0.0
      %736 = vmatprep.subr.mxu0 0.0
      %737 = vmatpush1.msra.mxu0 0.0
      %738 = vmatprep.subr.mxu0 0.0
      %739 = vmatpush1.msra.mxu0 0.0
      %740 = vmatprep.mubr.f32.mxu0 0.0
      %v741 = vand.u32 %v286, 4294901760
      %742 = vmatmul.mubr.f32.gmra.mrb[0].mxu0 %v741
      %v743 = vpop.f32.mrb[0].mxu0
      %v744 = vadd.f32 %v671, %v743
      %v745 = vpop.f32.mrb[0].mxu0
      %746 = vdwg.mxu0
      %v747 = vmax.f32 %v744, 0.0
      %v748 = vld [vmem:[%s3] sm:$0xff]
      %v749 = vld [vmem:[%s3 + $0x8] sm:$0xff]
      %v750 = vld [vmem:[%s3 + $0x10] sm:$0xff]
      %v751 = vld [vmem:[%s3 + $0x18] sm:$0xff]
      %v752 = vld [vmem:[%s3 + $0x20] sm:$0xff]
      %v753 = vld [vmem:[%s3 + $0x28] sm:$0xff]
      %v754 = vld [vmem:[%s3 + $0x30] sm:$0xff]
      %v755 = vld [vmem:[%s3 + $0x38] sm:$0xff]
      %v756 = vld [vmem:[%s3 + $0x40] sm:$0xff]
      %v757 = vld [vmem:[%s3 + $0x48] sm:$0xff]
      %v758 = vld [vmem:[%s3 + $0x50] sm:$0xff]
      %v759 = vld [vmem:[%s3 + $0x58] sm:$0xff]
      %v760 = vld [vmem:[%s3 + $0x60] sm:$0xff]
      %v761 = vld [vmem:[%s3 + $0x68] sm:$0xff]
      %v762 = vld [vmem:[%s3 + $0x70] sm:$0xff]
      %v763 = vld [vmem:[%s3 + $0x78] sm:$0xff]
      %v764 = vld [vmem:[%s4] sm:$0x1]
      %v766 = vlaneseq
      %v767 = vshrl.u32 %v766, 7
      %v768 = vsub.s32 0, %v767
      %v769 = vrot.slane %v764, %v768
      %771 = vmatprep.subr.mxu0 0.0
      %v772 = vand.u32 %v748, 4294901760
      %773 = vmatpush1.msra.mxu0 %v772
      %774 = vmatprep.subr.mxu0 0.0
      %v775 = vand.u32 %v749, 4294901760
      %776 = vmatpush1.msra.mxu0 %v775
      %777 = vmatprep.subr.mxu0 0.0
      %v778 = vand.u32 %v750, 4294901760
      %779 = vmatpush1.msra.mxu0 %v778
      %780 = vmatprep.subr.mxu0 0.0
      %v781 = vand.u32 %v751, 4294901760
      %782 = vmatpush1.msra.mxu0 %v781
      %783 = vmatprep.subr.mxu0 0.0
      %v784 = vand.u32 %v752, 4294901760
      %785 = vmatpush1.msra.mxu0 %v784
      %786 = vmatprep.subr.mxu0 0.0
      %v787 = vand.u32 %v753, 4294901760
      %788 = vmatpush1.msra.mxu0 %v787
      %789 = vmatprep.subr.mxu0 0.0
      %v790 = vand.u32 %v754, 4294901760
      %791 = vmatpush1.msra.mxu0 %v790
      %792 = vmatprep.subr.mxu0 0.0
      %v793 = vand.u32 %v755, 4294901760
      %794 = vmatpush1.msra.mxu0 %v793
      %795 = vmatprep.subr.mxu0 0.0
      %v796 = vand.u32 %v756, 4294901760
      %797 = vmatpush1.msra.mxu0 %v796
      %798 = vmatprep.subr.mxu0 0.0
      %v799 = vand.u32 %v757, 4294901760
      %800 = vmatpush1.msra.mxu0 %v799
      %801 = vmatprep.subr.mxu0 0.0
      %v802 = vand.u32 %v758, 4294901760
      %803 = vmatpush1.msra.mxu0 %v802
      %804 = vmatprep.subr.mxu0 0.0
      %v805 = vand.u32 %v759, 4294901760
      %806 = vmatpush1.msra.mxu0 %v805
      %807 = vmatprep.subr.mxu0 0.0
      %v808 = vand.u32 %v760, 4294901760
      %809 = vmatpush1.msra.mxu0 %v808
      %810 = vmatprep.subr.mxu0 0.0
      %v811 = vand.u32 %v761, 4294901760
      %812 = vmatpush1.msra.mxu0 %v811
      %813 = vmatprep.subr.mxu0 0.0
      %v814 = vand.u32 %v762, 4294901760
      %815 = vmatpush1.msra.mxu0 %v814
      %816 = vmatprep.subr.mxu0 0.0
      %v817 = vand.u32 %v763, 4294901760
      %818 = vmatpush1.msra.mxu0 %v817
      %819 = vmatprep.subr.mxu0 0.0
      %820 = vmatpush1.msra.mxu0 0.0
      %821 = vmatprep.subr.mxu0 0.0
      %822 = vmatpush1.msra.mxu0 0.0
      %823 = vmatprep.subr.mxu0 0.0
      %824 = vmatpush1.msra.mxu0 0.0
      %825 = vmatprep.subr.mxu0 0.0
      %826 = vmatpush1.msra.mxu0 0.0
      %827 = vmatprep.subr.mxu0 0.0
      %828 = vmatpush1.msra.mxu0 0.0
      %829 = vmatprep.subr.mxu0 0.0
      %830 = vmatpush1.msra.mxu0 0.0
      %831 = vmatprep.subr.mxu0 0.0
      %832 = vmatpush1.msra.mxu0 0.0
      %833 = vmatprep.subr.mxu0 0.0
      %834 = vmatpush1.msra.mxu0 0.0
      %835 = vmatprep.subr.mxu0 0.0
      %836 = vmatpush1.msra.mxu0 0.0
      %837 = vmatprep.subr.mxu0 0.0
      %838 = vmatpush1.msra.mxu0 0.0
      %839 = vmatprep.subr.mxu0 0.0
      %840 = vmatpush1.msra.mxu0 0.0
      %841 = vmatprep.subr.mxu0 0.0
      %842 = vmatpush1.msra.mxu0 0.0
      %843 = vmatprep.subr.mxu0 0.0
      %844 = vmatpush1.msra.mxu0 0.0
      %845 = vmatprep.subr.mxu0 0.0
      %846 = vmatpush1.msra.mxu0 0.0
      %847 = vmatprep.subr.mxu0 0.0
      %848 = vmatpush1.msra.mxu0 0.0
      %849 = vmatprep.subr.mxu0 0.0
      %850 = vmatpush1.msra.mxu0 0.0
      %851 = vmatprep.mubr.f32.mxu0 0.0
      %v852 = vand.u32 %v747, 4294901760
      %v853 = vsub.f32 %v747, %v852
      %v854 = vand.u32 %v853, 4294901760
      %v855 = vsub.f32 %v853, %v854
      %v856 = vand.u32 %v855, 4294901760
      %857 = vmatmul.mubr.f32.gmra.mrb[0].mxu0 %v856
      %v858 = vpop.f32.mrb[0].mxu0
      %v859 = vadd.f32 %v769, %v858
      %v860 = vpop.f32.mrb[0].mxu0
      %861 = vdwg.mxu0
      %862 = vmatprep.subr.mxu0 0.0
      %v863 = vand.u32 %v748, 4294901760
      %v864 = vsub.f32 %v748, %v863
      %v865 = vand.u32 %v864, 4294901760
      %v866 = vsub.f32 %v864, %v865
      %v867 = vand.u32 %v866, 4294901760
      %868 = vmatpush1.msra.mxu0 %v867
      %869 = vmatprep.subr.mxu0 0.0
      %v870 = vand.u32 %v749, 4294901760
      %v871 = vsub.f32 %v749, %v870
      %v872 = vand.u32 %v871, 4294901760
      %v873 = vsub.f32 %v871, %v872
      %v874 = vand.u32 %v873, 4294901760
      %875 = vmatpush1.msra.mxu0 %v874
      %876 = vmatprep.subr.mxu0 0.0
      %v877 = vand.u32 %v750, 4294901760
      %v878 = vsub.f32 %v750, %v877
      %v879 = vand.u32 %v878, 4294901760
      %v880 = vsub.f32 %v878, %v879
      %v881 = vand.u32 %v880, 4294901760
      %882 = vmatpush1.msra.mxu0 %v881
      %883 = vmatprep.subr.mxu0 0.0
      %v884 = vand.u32 %v751, 4294901760
      %v885 = vsub.f32 %v751, %v884
      %v886 = vand.u32 %v885, 4294901760
      %v887 = vsub.f32 %v885, %v886
      %v888 = vand.u32 %v887, 4294901760
      %889 = vmatpush1.msra.mxu0 %v888
      %890 = vmatprep.subr.mxu0 0.0
      %v891 = vand.u32 %v752, 4294901760
      %v892 = vsub.f32 %v752, %v891
      %v893 = vand.u32 %v892, 4294901760
      %v894 = vsub.f32 %v892, %v893
      %v895 = vand.u32 %v894, 4294901760
      %896 = vmatpush1.msra.mxu0 %v895
      %897 = vmatprep.subr.mxu0 0.0
      %v898 = vand.u32 %v753, 4294901760
      %v899 = vsub.f32 %v753, %v898
      %v900 = vand.u32 %v899, 4294901760
      %v901 = vsub.f32 %v899, %v900
      %v902 = vand.u32 %v901, 4294901760
      %903 = vmatpush1.msra.mxu0 %v902
      %904 = vmatprep.subr.mxu0 0.0
      %v905 = vand.u32 %v754, 4294901760
      %v906 = vsub.f32 %v754, %v905
      %v907 = vand.u32 %v906, 4294901760
      %v908 = vsub.f32 %v906, %v907
      %v909 = vand.u32 %v908, 4294901760
      %910 = vmatpush1.msra.mxu0 %v909
      %911 = vmatprep.subr.mxu0 0.0
      %v912 = vand.u32 %v755, 4294901760
      %v913 = vsub.f32 %v755, %v912
      %v914 = vand.u32 %v913, 4294901760
      %v915 = vsub.f32 %v913, %v914
      %v916 = vand.u32 %v915, 4294901760
      %917 = vmatpush1.msra.mxu0 %v916
      %918 = vmatprep.subr.mxu0 0.0
      %v919 = vand.u32 %v756, 4294901760
      %v920 = vsub.f32 %v756, %v919
      %v921 = vand.u32 %v920, 4294901760
      %v922 = vsub.f32 %v920, %v921
      %v923 = vand.u32 %v922, 4294901760
      %924 = vmatpush1.msra.mxu0 %v923
      %925 = vmatprep.subr.mxu0 0.0
      %v926 = vand.u32 %v757, 4294901760
      %v927 = vsub.f32 %v757, %v926
      %v928 = vand.u32 %v927, 4294901760
      %v929 = vsub.f32 %v927, %v928
      %v930 = vand.u32 %v929, 4294901760
      %931 = vmatpush1.msra.mxu0 %v930
      %932 = vmatprep.subr.mxu0 0.0
      %v933 = vand.u32 %v758, 4294901760
      %v934 = vsub.f32 %v758, %v933
      %v935 = vand.u32 %v934, 4294901760
      %v936 = vsub.f32 %v934, %v935
      %v937 = vand.u32 %v936, 4294901760
      %938 = vmatpush1.msra.mxu0 %v937
      %939 = vmatprep.subr.mxu0 0.0
      %v940 = vand.u32 %v759, 4294901760
      %v941 = vsub.f32 %v759, %v940
      %v942 = vand.u32 %v941, 4294901760
      %v943 = vsub.f32 %v941, %v942
      %v944 = vand.u32 %v943, 4294901760
      %945 = vmatpush1.msra.mxu0 %v944
      %946 = vmatprep.subr.mxu0 0.0
      %v947 = vand.u32 %v760, 4294901760
      %v948 = vsub.f32 %v760, %v947
      %v949 = vand.u32 %v948, 4294901760
      %v950 = vsub.f32 %v948, %v949
      %v951 = vand.u32 %v950, 4294901760
      %952 = vmatpush1.msra.mxu0 %v951
      %953 = vmatprep.subr.mxu0 0.0
      %v954 = vand.u32 %v761, 4294901760
      %v955 = vsub.f32 %v761, %v954
      %v956 = vand.u32 %v955, 4294901760
      %v957 = vsub.f32 %v955, %v956
      %v958 = vand.u32 %v957, 4294901760
      %959 = vmatpush1.msra.mxu0 %v958
      %960 = vmatprep.subr.mxu0 0.0
      %v961 = vand.u32 %v762, 4294901760
      %v962 = vsub.f32 %v762, %v961
      %v963 = vand.u32 %v962, 4294901760
      %v964 = vsub.f32 %v962, %v963
      %v965 = vand.u32 %v964, 4294901760
      %966 = vmatpush1.msra.mxu0 %v965
      %967 = vmatprep.subr.mxu0 0.0
      %v968 = vand.u32 %v763, 4294901760
      %v969 = vsub.f32 %v763, %v968
      %v970 = vand.u32 %v969, 4294901760
      %v971 = vsub.f32 %v969, %v970
      %v972 = vand.u32 %v971, 4294901760
      %973 = vmatpush1.msra.mxu0 %v972
      %974 = vmatprep.subr.mxu0 0.0
      %975 = vmatpush1.msra.mxu0 0.0
      %976 = vmatprep.subr.mxu0 0.0
      %977 = vmatpush1.msra.mxu0 0.0
      %978 = vmatprep.subr.mxu0 0.0
      %979 = vmatpush1.msra.mxu0 0.0
      %980 = vmatprep.subr.mxu0 0.0
      %981 = vmatpush1.msra.mxu0 0.0
      %982 = vmatprep.subr.mxu0 0.0
      %983 = vmatpush1.msra.mxu0 0.0
      %984 = vmatprep.subr.mxu0 0.0
      %985 = vmatpush1.msra.mxu0 0.0
      %986 = vmatprep.subr.mxu0 0.0
      %987 = vmatpush1.msra.mxu0 0.0
      %988 = vmatprep.subr.mxu0 0.0
      %989 = vmatpush1.msra.mxu0 0.0
      %990 = vmatprep.subr.mxu0 0.0
      %991 = vmatpush1.msra.mxu0 0.0
      %992 = vmatprep.subr.mxu0 0.0
      %993 = vmatpush1.msra.mxu0 0.0
      %994 = vmatprep.subr.mxu0 0.0
      %995 = vmatpush1.msra.mxu0 0.0
      %996 = vmatprep.subr.mxu0 0.0
      %997 = vmatpush1.msra.mxu0 0.0
      %998 = vmatprep.subr.mxu0 0.0
      %999 = vmatpush1.msra.mxu0 0.0
      %1000 = vmatprep.subr.mxu0 0.0
      %1001 = vmatpush1.msra.mxu0 0.0
      %1002 = vmatprep.subr.mxu0 0.0
      %1003 = vmatpush1.msra.mxu0 0.0
      %1004 = vmatprep.subr.mxu0 0.0
      %1005 = vmatpush1.msra.mxu0 0.0
      %1006 = vmatprep.mubr.f32.mxu0 0.0
      %v1007 = vand.u32 %v747, 4294901760
      %1008 = vmatmul.mubr.f32.gmra.mrb[0].mxu0 %v1007
      %v1009 = vpop.f32.mrb[0].mxu0
      %v1010 = vadd.f32 %v859, %v1009
      %v1011 = vpop.f32.mrb[0].mxu0
      %1012 = vdwg.mxu0
      %1013 = vmatprep.subr.mxu0 0.0
      %v1014 = vand.u32 %v748, 4294901760
      %v1015 = vsub.f32 %v748, %v1014
      %1016 = vmatpush1.msra.mxu0 %v1015
      %1017 = vmatprep.subr.mxu0 0.0
      %v1018 = vand.u32 %v749, 4294901760
      %v1019 = vsub.f32 %v749, %v1018
      %1020 = vmatpush1.msra.mxu0 %v1019
      %1021 = vmatprep.subr.mxu0 0.0
      %v1022 = vand.u32 %v750, 4294901760
      %v1023 = vsub.f32 %v750, %v1022
      %1024 = vmatpush1.msra.mxu0 %v1023
      %1025 = vmatprep.subr.mxu0 0.0
      %v1026 = vand.u32 %v751, 4294901760
      %v1027 = vsub.f32 %v751, %v1026
      %1028 = vmatpush1.msra.mxu0 %v1027
      %1029 = vmatprep.subr.mxu0 0.0
      %v1030 = vand.u32 %v752, 4294901760
      %v1031 = vsub.f32 %v752, %v1030
      %1032 = vmatpush1.msra.mxu0 %v1031
      %1033 = vmatprep.subr.mxu0 0.0
      %v1034 = vand.u32 %v753, 4294901760
      %v1035 = vsub.f32 %v753, %v1034
      %1036 = vmatpush1.msra.mxu0 %v1035
      %1037 = vmatprep.subr.mxu0 0.0
      %v1038 = vand.u32 %v754, 4294901760
      %v1039 = vsub.f32 %v754, %v1038
      %1040 = vmatpush1.msra.mxu0 %v1039
      %1041 = vmatprep.subr.mxu0 0.0
      %v1042 = vand.u32 %v755, 4294901760
      %v1043 = vsub.f32 %v755, %v1042
      %1044 = vmatpush1.msra.mxu0 %v1043
      %1045 = vmatprep.subr.mxu0 0.0
      %v1046 = vand.u32 %v756, 4294901760
      %v1047 = vsub.f32 %v756, %v1046
      %1048 = vmatpush1.msra.mxu0 %v1047
      %1049 = vmatprep.subr.mxu0 0.0
      %v1050 = vand.u32 %v757, 4294901760
      %v1051 = vsub.f32 %v757, %v1050
      %1052 = vmatpush1.msra.mxu0 %v1051
      %1053 = vmatprep.subr.mxu0 0.0
      %v1054 = vand.u32 %v758, 4294901760
      %v1055 = vsub.f32 %v758, %v1054
      %1056 = vmatpush1.msra.mxu0 %v1055
      %1057 = vmatprep.subr.mxu0 0.0
      %v1058 = vand.u32 %v759, 4294901760
      %v1059 = vsub.f32 %v759, %v1058
      %1060 = vmatpush1.msra.mxu0 %v1059
      %1061 = vmatprep.subr.mxu0 0.0
      %v1062 = vand.u32 %v760, 4294901760
      %v1063 = vsub.f32 %v760, %v1062
      %1064 = vmatpush1.msra.mxu0 %v1063
      %1065 = vmatprep.subr.mxu0 0.0
      %v1066 = vand.u32 %v761, 4294901760
      %v1067 = vsub.f32 %v761, %v1066
      %1068 = vmatpush1.msra.mxu0 %v1067
      %1069 = vmatprep.subr.mxu0 0.0
      %v1070 = vand.u32 %v762, 4294901760
      %v1071 = vsub.f32 %v762, %v1070
      %1072 = vmatpush1.msra.mxu0 %v1071
      %1073 = vmatprep.subr.mxu0 0.0
      %v1074 = vand.u32 %v763, 4294901760
      %v1075 = vsub.f32 %v763, %v1074
      %1076 = vmatpush1.msra.mxu0 %v1075
      %1077 = vmatprep.subr.mxu0 0.0
      %1078 = vmatpush1.msra.mxu0 0.0
      %1079 = vmatprep.subr.mxu0 0.0
      %1080 = vmatpush1.msra.mxu0 0.0
      %1081 = vmatprep.subr.mxu0 0.0
      %1082 = vmatpush1.msra.mxu0 0.0
      %1083 = vmatprep.subr.mxu0 0.0
      %1084 = vmatpush1.msra.mxu0 0.0
      %1085 = vmatprep.subr.mxu0 0.0
      %1086 = vmatpush1.msra.mxu0 0.0
      %1087 = vmatprep.subr.mxu0 0.0
      %1088 = vmatpush1.msra.mxu0 0.0
      %1089 = vmatprep.subr.mxu0 0.0
      %1090 = vmatpush1.msra.mxu0 0.0
      %1091 = vmatprep.subr.mxu0 0.0
      %1092 = vmatpush1.msra.mxu0 0.0
      %1093 = vmatprep.subr.mxu0 0.0
      %1094 = vmatpush1.msra.mxu0 0.0
      %1095 = vmatprep.subr.mxu0 0.0
      %1096 = vmatpush1.msra.mxu0 0.0
      %1097 = vmatprep.subr.mxu0 0.0
      %1098 = vmatpush1.msra.mxu0 0.0
      %1099 = vmatprep.subr.mxu0 0.0
      %1100 = vmatpush1.msra.mxu0 0.0
      %1101 = vmatprep.subr.mxu0 0.0
      %1102 = vmatpush1.msra.mxu0 0.0
      %1103 = vmatprep.subr.mxu0 0.0
      %1104 = vmatpush1.msra.mxu0 0.0
      %1105 = vmatprep.subr.mxu0 0.0
      %1106 = vmatpush1.msra.mxu0 0.0
      %1107 = vmatprep.subr.mxu0 0.0
      %1108 = vmatpush1.msra.mxu0 0.0
      %1109 = vmatprep.mubr.f32.mxu0 0.0
      %v1110 = vand.u32 %v747, 4294901760
      %v1111 = vsub.f32 %v747, %v1110
      %1112 = vmatmul.mubr.f32.gmra.mrb[0].mxu0 %v1111
      %v1113 = vpop.f32.mrb[0].mxu0
      %v1114 = vadd.f32 %v1010, %v1113
      %v1115 = vpop.f32.mrb[0].mxu0
      %1116 = vdwg.mxu0
      %1117 = vmatprep.subr.mxu0 0.0
      %v1118 = vand.u32 %v748, 4294901760
      %1119 = vmatpush1.msra.mxu0 %v1118
      %1120 = vmatprep.subr.mxu0 0.0
      %v1121 = vand.u32 %v749, 4294901760
      %1122 = vmatpush1.msra.mxu0 %v1121
      %1123 = vmatprep.subr.mxu0 0.0
      %v1124 = vand.u32 %v750, 4294901760
      %1125 = vmatpush1.msra.mxu0 %v1124
      %1126 = vmatprep.subr.mxu0 0.0
      %v1127 = vand.u32 %v751, 4294901760
      %1128 = vmatpush1.msra.mxu0 %v1127
      %1129 = vmatprep.subr.mxu0 0.0
      %v1130 = vand.u32 %v752, 4294901760
      %1131 = vmatpush1.msra.mxu0 %v1130
      %1132 = vmatprep.subr.mxu0 0.0
      %v1133 = vand.u32 %v753, 4294901760
      %1134 = vmatpush1.msra.mxu0 %v1133
      %1135 = vmatprep.subr.mxu0 0.0
      %v1136 = vand.u32 %v754, 4294901760
      %1137 = vmatpush1.msra.mxu0 %v1136
      %1138 = vmatprep.subr.mxu0 0.0
      %v1139 = vand.u32 %v755, 4294901760
      %1140 = vmatpush1.msra.mxu0 %v1139
      %1141 = vmatprep.subr.mxu0 0.0
      %v1142 = vand.u32 %v756, 4294901760
      %1143 = vmatpush1.msra.mxu0 %v1142
      %1144 = vmatprep.subr.mxu0 0.0
      %v1145 = vand.u32 %v757, 4294901760
      %1146 = vmatpush1.msra.mxu0 %v1145
      %1147 = vmatprep.subr.mxu0 0.0
      %v1148 = vand.u32 %v758, 4294901760
      %1149 = vmatpush1.msra.mxu0 %v1148
      %1150 = vmatprep.subr.mxu0 0.0
      %v1151 = vand.u32 %v759, 4294901760
      %1152 = vmatpush1.msra.mxu0 %v1151
      %1153 = vmatprep.subr.mxu0 0.0
      %v1154 = vand.u32 %v760, 4294901760
      %1155 = vmatpush1.msra.mxu0 %v1154
      %1156 = vmatprep.subr.mxu0 0.0
      %v1157 = vand.u32 %v761, 4294901760
      %1158 = vmatpush1.msra.mxu0 %v1157
      %1159 = vmatprep.subr.mxu0 0.0
      %v1160 = vand.u32 %v762, 4294901760
      %1161 = vmatpush1.msra.mxu0 %v1160
      %1162 = vmatprep.subr.mxu0 0.0
      %v1163 = vand.u32 %v763, 4294901760
      %1164 = vmatpush1.msra.mxu0 %v1163
      %1165 = vmatprep.subr.mxu0 0.0
      %1166 = vmatpush1.msra.mxu0 0.0
      %1167 = vmatprep.subr.mxu0 0.0
      %1168 = vmatpush1.msra.mxu0 0.0
      %1169 = vmatprep.subr.mxu0 0.0
      %1170 = vmatpush1.msra.mxu0 0.0
      %1171 = vmatprep.subr.mxu0 0.0
      %1172 = vmatpush1.msra.mxu0 0.0
      %1173 = vmatprep.subr.mxu0 0.0
      %1174 = vmatpush1.msra.mxu0 0.0
      %1175 = vmatprep.subr.mxu0 0.0
      %1176 = vmatpush1.msra.mxu0 0.0
      %1177 = vmatprep.subr.mxu0 0.0
      %1178 = vmatpush1.msra.mxu0 0.0
      %1179 = vmatprep.subr.mxu0 0.0
      %1180 = vmatpush1.msra.mxu0 0.0
      %1181 = vmatprep.subr.mxu0 0.0
      %1182 = vmatpush1.msra.mxu0 0.0
      %1183 = vmatprep.subr.mxu0 0.0
      %1184 = vmatpush1.msra.mxu0 0.0
      %1185 = vmatprep.subr.mxu0 0.0
      %1186 = vmatpush1.msra.mxu0 0.0
      %1187 = vmatprep.subr.mxu0 0.0
      %1188 = vmatpush1.msra.mxu0 0.0
      %1189 = vmatprep.subr.mxu0 0.0
      %1190 = vmatpush1.msra.mxu0 0.0
      %1191 = vmatprep.subr.mxu0 0.0
      %1192 = vmatpush1.msra.mxu0 0.0
      %1193 = vmatprep.subr.mxu0 0.0
      %1194 = vmatpush1.msra.mxu0 0.0
      %1195 = vmatprep.subr.mxu0 0.0
      %1196 = vmatpush1.msra.mxu0 0.0
      %1197 = vmatprep.mubr.f32.mxu0 0.0
      %v1198 = vand.u32 %v747, 4294901760
      %v1199 = vsub.f32 %v747, %v1198
      %v1200 = vand.u32 %v1199, 4294901760
      %1201 = vmatmul.mubr.f32.gmra.mrb[0].mxu0 %v1200
      %v1202 = vpop.f32.mrb[0].mxu0
      %v1203 = vadd.f32 %v1114, %v1202
      %v1204 = vpop.f32.mrb[0].mxu0
      %1205 = vdwg.mxu0
      %1206 = vmatprep.subr.mxu0 0.0
      %v1207 = vand.u32 %v748, 4294901760
      %v1208 = vsub.f32 %v748, %v1207
      %v1209 = vand.u32 %v1208, 4294901760
      %1210 = vmatpush1.msra.mxu0 %v1209
      %1211 = vmatprep.subr.mxu0 0.0
      %v1212 = vand.u32 %v749, 4294901760
      %v1213 = vsub.f32 %v749, %v1212
      %v1214 = vand.u32 %v1213, 4294901760
      %1215 = vmatpush1.msra.mxu0 %v1214
      %1216 = vmatprep.subr.mxu0 0.0
      %v1217 = vand.u32 %v750, 4294901760
      %v1218 = vsub.f32 %v750, %v1217
      %v1219 = vand.u32 %v1218, 4294901760
      %1220 = vmatpush1.msra.mxu0 %v1219
      %1221 = vmatprep.subr.mxu0 0.0
      %v1222 = vand.u32 %v751, 4294901760
      %v1223 = vsub.f32 %v751, %v1222
      %v1224 = vand.u32 %v1223, 4294901760
      %1225 = vmatpush1.msra.mxu0 %v1224
      %1226 = vmatprep.subr.mxu0 0.0
      %v1227 = vand.u32 %v752, 4294901760
      %v1228 = vsub.f32 %v752, %v1227
      %v1229 = vand.u32 %v1228, 4294901760
      %1230 = vmatpush1.msra.mxu0 %v1229
      %1231 = vmatprep.subr.mxu0 0.0
      %v1232 = vand.u32 %v753, 4294901760
      %v1233 = vsub.f32 %v753, %v1232
      %v1234 = vand.u32 %v1233, 4294901760
      %1235 = vmatpush1.msra.mxu0 %v1234
      %1236 = vmatprep.subr.mxu0 0.0
      %v1237 = vand.u32 %v754, 4294901760
      %v1238 = vsub.f32 %v754, %v1237
      %v1239 = vand.u32 %v1238, 4294901760
      %1240 = vmatpush1.msra.mxu0 %v1239
      %1241 = vmatprep.subr.mxu0 0.0
      %v1242 = vand.u32 %v755, 4294901760
      %v1243 = vsub.f32 %v755, %v1242
      %v1244 = vand.u32 %v1243, 4294901760
      %1245 = vmatpush1.msra.mxu0 %v1244
      %1246 = vmatprep.subr.mxu0 0.0
      %v1247 = vand.u32 %v756, 4294901760
      %v1248 = vsub.f32 %v756, %v1247
      %v1249 = vand.u32 %v1248, 4294901760
      %1250 = vmatpush1.msra.mxu0 %v1249
      %1251 = vmatprep.subr.mxu0 0.0
      %v1252 = vand.u32 %v757, 4294901760
      %v1253 = vsub.f32 %v757, %v1252
      %v1254 = vand.u32 %v1253, 4294901760
      %1255 = vmatpush1.msra.mxu0 %v1254
      %1256 = vmatprep.subr.mxu0 0.0
      %v1257 = vand.u32 %v758, 4294901760
      %v1258 = vsub.f32 %v758, %v1257
      %v1259 = vand.u32 %v1258, 4294901760
      %1260 = vmatpush1.msra.mxu0 %v1259
      %1261 = vmatprep.subr.mxu0 0.0
      %v1262 = vand.u32 %v759, 4294901760
      %v1263 = vsub.f32 %v759, %v1262
      %v1264 = vand.u32 %v1263, 4294901760
      %1265 = vmatpush1.msra.mxu0 %v1264
      %1266 = vmatprep.subr.mxu0 0.0
      %v1267 = vand.u32 %v760, 4294901760
      %v1268 = vsub.f32 %v760, %v1267
      %v1269 = vand.u32 %v1268, 4294901760
      %1270 = vmatpush1.msra.mxu0 %v1269
      %1271 = vmatprep.subr.mxu0 0.0
      %v1272 = vand.u32 %v761, 4294901760
      %v1273 = vsub.f32 %v761, %v1272
      %v1274 = vand.u32 %v1273, 4294901760
      %1275 = vmatpush1.msra.mxu0 %v1274
      %1276 = vmatprep.subr.mxu0 0.0
      %v1277 = vand.u32 %v762, 4294901760
      %v1278 = vsub.f32 %v762, %v1277
      %v1279 = vand.u32 %v1278, 4294901760
      %1280 = vmatpush1.msra.mxu0 %v1279
      %1281 = vmatprep.subr.mxu0 0.0
      %v1282 = vand.u32 %v763, 4294901760
      %v1283 = vsub.f32 %v763, %v1282
      %v1284 = vand.u32 %v1283, 4294901760
      %1285 = vmatpush1.msra.mxu0 %v1284
      %1286 = vmatprep.subr.mxu0 0.0
      %1287 = vmatpush1.msra.mxu0 0.0
      %1288 = vmatprep.subr.mxu0 0.0
      %1289 = vmatpush1.msra.mxu0 0.0
      %1290 = vmatprep.subr.mxu0 0.0
      %1291 = vmatpush1.msra.mxu0 0.0
      %1292 = vmatprep.subr.mxu0 0.0
      %1293 = vmatpush1.msra.mxu0 0.0
      %1294 = vmatprep.subr.mxu0 0.0
      %1295 = vmatpush1.msra.mxu0 0.0
      %1296 = vmatprep.subr.mxu0 0.0
      %1297 = vmatpush1.msra.mxu0 0.0
      %1298 = vmatprep.subr.mxu0 0.0
      %1299 = vmatpush1.msra.mxu0 0.0
      %1300 = vmatprep.subr.mxu0 0.0
      %1301 = vmatpush1.msra.mxu0 0.0
      %1302 = vmatprep.subr.mxu0 0.0
      %1303 = vmatpush1.msra.mxu0 0.0
      %1304 = vmatprep.subr.mxu0 0.0
      %1305 = vmatpush1.msra.mxu0 0.0
      %1306 = vmatprep.subr.mxu0 0.0
      %1307 = vmatpush1.msra.mxu0 0.0
      %1308 = vmatprep.subr.mxu0 0.0
      %1309 = vmatpush1.msra.mxu0 0.0
      %1310 = vmatprep.subr.mxu0 0.0
      %1311 = vmatpush1.msra.mxu0 0.0
      %1312 = vmatprep.subr.mxu0 0.0
      %1313 = vmatpush1.msra.mxu0 0.0
      %1314 = vmatprep.subr.mxu0 0.0
      %1315 = vmatpush1.msra.mxu0 0.0
      %1316 = vmatprep.subr.mxu0 0.0
      %1317 = vmatpush1.msra.mxu0 0.0
      %1318 = vmatprep.mubr.f32.mxu0 0.0
      %v1319 = vand.u32 %v747, 4294901760
      %1320 = vmatmul.mubr.f32.gmra.mrb[0].mxu0 %v1319
      %v1321 = vpop.f32.mrb[0].mxu0
      %v1322 = vadd.f32 %v1203, %v1321
      %v1323 = vpop.f32.mrb[0].mxu0
      %1324 = vdwg.mxu0
      %1325 = vmatprep.subr.mxu0 0.0
      %v1326 = vand.u32 %v748, 4294901760
      %1327 = vmatpush1.msra.mxu0 %v1326
      %1328 = vmatprep.subr.mxu0 0.0
      %v1329 = vand.u32 %v749, 4294901760
      %1330 = vmatpush1.msra.mxu0 %v1329
      %1331 = vmatprep.subr.mxu0 0.0
      %v1332 = vand.u32 %v750, 4294901760
      %1333 = vmatpush1.msra.mxu0 %v1332
      %1334 = vmatprep.subr.mxu0 0.0
      %v1335 = vand.u32 %v751, 4294901760
      %1336 = vmatpush1.msra.mxu0 %v1335
      %1337 = vmatprep.subr.mxu0 0.0
      %v1338 = vand.u32 %v752, 4294901760
      %1339 = vmatpush1.msra.mxu0 %v1338
      %1340 = vmatprep.subr.mxu0 0.0
      %v1341 = vand.u32 %v753, 4294901760
      %1342 = vmatpush1.msra.mxu0 %v1341
      %1343 = vmatprep.subr.mxu0 0.0
      %v1344 = vand.u32 %v754, 4294901760
      %1345 = vmatpush1.msra.mxu0 %v1344
      %1346 = vmatprep.subr.mxu0 0.0
      %v1347 = vand.u32 %v755, 4294901760
      %1348 = vmatpush1.msra.mxu0 %v1347
      %1349 = vmatprep.subr.mxu0 0.0
      %v1350 = vand.u32 %v756, 4294901760
      %1351 = vmatpush1.msra.mxu0 %v1350
      %1352 = vmatprep.subr.mxu0 0.0
      %v1353 = vand.u32 %v757, 4294901760
      %1354 = vmatpush1.msra.mxu0 %v1353
      %1355 = vmatprep.subr.mxu0 0.0
      %v1356 = vand.u32 %v758, 4294901760
      %1357 = vmatpush1.msra.mxu0 %v1356
      %1358 = vmatprep.subr.mxu0 0.0
      %v1359 = vand.u32 %v759, 4294901760
      %1360 = vmatpush1.msra.mxu0 %v1359
      %1361 = vmatprep.subr.mxu0 0.0
      %v1362 = vand.u32 %v760, 4294901760
      %1363 = vmatpush1.msra.mxu0 %v1362
      %1364 = vmatprep.subr.mxu0 0.0
      %v1365 = vand.u32 %v761, 4294901760
      %1366 = vmatpush1.msra.mxu0 %v1365
      %1367 = vmatprep.subr.mxu0 0.0
      %v1368 = vand.u32 %v762, 4294901760
      %1369 = vmatpush1.msra.mxu0 %v1368
      %1370 = vmatprep.subr.mxu0 0.0
      %v1371 = vand.u32 %v763, 4294901760
      %1372 = vmatpush1.msra.mxu0 %v1371
      %1373 = vmatprep.subr.mxu0 0.0
      %1374 = vmatpush1.msra.mxu0 0.0
      %1375 = vmatprep.subr.mxu0 0.0
      %1376 = vmatpush1.msra.mxu0 0.0
      %1377 = vmatprep.subr.mxu0 0.0
      %1378 = vmatpush1.msra.mxu0 0.0
      %1379 = vmatprep.subr.mxu0 0.0
      %1380 = vmatpush1.msra.mxu0 0.0
      %1381 = vmatprep.subr.mxu0 0.0
      %1382 = vmatpush1.msra.mxu0 0.0
      %1383 = vmatprep.subr.mxu0 0.0
      %1384 = vmatpush1.msra.mxu0 0.0
      %1385 = vmatprep.subr.mxu0 0.0
      %1386 = vmatpush1.msra.mxu0 0.0
      %1387 = vmatprep.subr.mxu0 0.0
      %1388 = vmatpush1.msra.mxu0 0.0
      %1389 = vmatprep.subr.mxu0 0.0
      %1390 = vmatpush1.msra.mxu0 0.0
      %1391 = vmatprep.subr.mxu0 0.0
      %1392 = vmatpush1.msra.mxu0 0.0
      %1393 = vmatprep.subr.mxu0 0.0
      %1394 = vmatpush1.msra.mxu0 0.0
      %1395 = vmatprep.subr.mxu0 0.0
      %1396 = vmatpush1.msra.mxu0 0.0
      %1397 = vmatprep.subr.mxu0 0.0
      %1398 = vmatpush1.msra.mxu0 0.0
      %1399 = vmatprep.subr.mxu0 0.0
      %1400 = vmatpush1.msra.mxu0 0.0
      %1401 = vmatprep.subr.mxu0 0.0
      %1402 = vmatpush1.msra.mxu0 0.0
      %1403 = vmatprep.subr.mxu0 0.0
      %1404 = vmatpush1.msra.mxu0 0.0
      %1405 = vmatprep.mubr.f32.mxu0 0.0
      %v1406 = vand.u32 %v747, 4294901760
      %1407 = vmatmul.mubr.f32.gmra.mrb[0].mxu0 %v1406
      %v1408 = vpop.f32.mrb[0].mxu0
      %v1409 = vadd.f32 %v1322, %v1408
      %v1410 = vpop.f32.mrb[0].mxu0
      %1411 = vdwg.mxu0
      %v1412 = vmax.f32 %v1409, 0.0
      %v1413 = vld [vmem:[%s5] sm:$0xff]
      %v1414 = vld [vmem:[%s5 + $0x8] sm:$0xff]
      %v1415 = vld [vmem:[%s5 + $0x10] sm:$0xff]
      %v1416 = vld [vmem:[%s5 + $0x18] sm:$0xff]
      %v1417 = vld [vmem:[%s5 + $0x20] sm:$0xff]
      %v1418 = vld [vmem:[%s5 + $0x28] sm:$0xff]
      %v1419 = vld [vmem:[%s5 + $0x30] sm:$0xff]
      %v1420 = vld [vmem:[%s5 + $0x38] sm:$0xff]
      %v1421 = vld [vmem:[%s5 + $0x40] sm:$0xff]
      %v1422 = vld [vmem:[%s5 + $0x48] sm:$0xff]
      %v1423 = vld [vmem:[%s5 + $0x50] sm:$0xff]
      %v1424 = vld [vmem:[%s5 + $0x58] sm:$0xff]
      %v1425 = vld [vmem:[%s5 + $0x60] sm:$0xff]
      %v1426 = vld [vmem:[%s5 + $0x68] sm:$0xff]
      %v1427 = vld [vmem:[%s5 + $0x70] sm:$0xff]
      %v1428 = vld [vmem:[%s5 + $0x78] sm:$0xff]
      %v1429 = vld [vmem:[%s6] sm:$0x1]
      %v1431 = vlaneseq
      %v1432 = vshrl.u32 %v1431, 7
      %v1433 = vsub.s32 0, %v1432
      %v1434 = vrot.slane %v1429, %v1433
      %1436 = vmatprep.subr.mxu0 0.0
      %v1437 = vand.u32 %v1413, 4294901760
      %1438 = vmatpush1.msra.mxu0 %v1437
      %1439 = vmatprep.subr.mxu0 0.0
      %v1440 = vand.u32 %v1414, 4294901760
      %1441 = vmatpush1.msra.mxu0 %v1440
      %1442 = vmatprep.subr.mxu0 0.0
      %v1443 = vand.u32 %v1415, 4294901760
      %1444 = vmatpush1.msra.mxu0 %v1443
      %1445 = vmatprep.subr.mxu0 0.0
      %v1446 = vand.u32 %v1416, 4294901760
      %1447 = vmatpush1.msra.mxu0 %v1446
      %1448 = vmatprep.subr.mxu0 0.0
      %v1449 = vand.u32 %v1417, 4294901760
      %1450 = vmatpush1.msra.mxu0 %v1449
      %1451 = vmatprep.subr.mxu0 0.0
      %v1452 = vand.u32 %v1418, 4294901760
      %1453 = vmatpush1.msra.mxu0 %v1452
      %1454 = vmatprep.subr.mxu0 0.0
      %v1455 = vand.u32 %v1419, 4294901760
      %1456 = vmatpush1.msra.mxu0 %v1455
      %1457 = vmatprep.subr.mxu0 0.0
      %v1458 = vand.u32 %v1420, 4294901760
      %1459 = vmatpush1.msra.mxu0 %v1458
      %1460 = vmatprep.subr.mxu0 0.0
      %v1461 = vand.u32 %v1421, 4294901760
      %1462 = vmatpush1.msra.mxu0 %v1461
      %1463 = vmatprep.subr.mxu0 0.0
      %v1464 = vand.u32 %v1422, 4294901760
      %1465 = vmatpush1.msra.mxu0 %v1464
      %1466 = vmatprep.subr.mxu0 0.0
      %v1467 = vand.u32 %v1423, 4294901760
      %1468 = vmatpush1.msra.mxu0 %v1467
      %1469 = vmatprep.subr.mxu0 0.0
      %v1470 = vand.u32 %v1424, 4294901760
      %1471 = vmatpush1.msra.mxu0 %v1470
      %1472 = vmatprep.subr.mxu0 0.0
      %v1473 = vand.u32 %v1425, 4294901760
      %1474 = vmatpush1.msra.mxu0 %v1473
      %1475 = vmatprep.subr.mxu0 0.0
      %v1476 = vand.u32 %v1426, 4294901760
      %1477 = vmatpush1.msra.mxu0 %v1476
      %1478 = vmatprep.subr.mxu0 0.0
      %v1479 = vand.u32 %v1427, 4294901760
      %1480 = vmatpush1.msra.mxu0 %v1479
      %1481 = vmatprep.subr.mxu0 0.0
      %v1482 = vand.u32 %v1428, 4294901760
      %1483 = vmatpush1.msra.mxu0 %v1482
      %1484 = vmatprep.subr.mxu0 0.0
      %1485 = vmatpush1.msra.mxu0 0.0
      %1486 = vmatprep.subr.mxu0 0.0
      %1487 = vmatpush1.msra.mxu0 0.0
      %1488 = vmatprep.subr.mxu0 0.0
      %1489 = vmatpush1.msra.mxu0 0.0
      %1490 = vmatprep.subr.mxu0 0.0
      %1491 = vmatpush1.msra.mxu0 0.0
      %1492 = vmatprep.subr.mxu0 0.0
      %1493 = vmatpush1.msra.mxu0 0.0
      %1494 = vmatprep.subr.mxu0 0.0
      %1495 = vmatpush1.msra.mxu0 0.0
      %1496 = vmatprep.subr.mxu0 0.0
      %1497 = vmatpush1.msra.mxu0 0.0
      %1498 = vmatprep.subr.mxu0 0.0
      %1499 = vmatpush1.msra.mxu0 0.0
      %1500 = vmatprep.subr.mxu0 0.0
      %1501 = vmatpush1.msra.mxu0 0.0
      %1502 = vmatprep.subr.mxu0 0.0
      %1503 = vmatpush1.msra.mxu0 0.0
      %1504 = vmatprep.subr.mxu0 0.0
      %1505 = vmatpush1.msra.mxu0 0.0
      %1506 = vmatprep.subr.mxu0 0.0
      %1507 = vmatpush1.msra.mxu0 0.0
      %1508 = vmatprep.subr.mxu0 0.0
      %1509 = vmatpush1.msra.mxu0 0.0
      %1510 = vmatprep.subr.mxu0 0.0
      %1511 = vmatpush1.msra.mxu0 0.0
      %1512 = vmatprep.subr.mxu0 0.0
      %1513 = vmatpush1.msra.mxu0 0.0
      %1514 = vmatprep.subr.mxu0 0.0
      %1515 = vmatpush1.msra.mxu0 0.0
      %1516 = vmatprep.mubr.f32.mxu0 0.0
      %v1517 = vand.u32 %v1412, 4294901760
      %v1518 = vsub.f32 %v1412, %v1517
      %v1519 = vand.u32 %v1518, 4294901760
      %v1520 = vsub.f32 %v1518, %v1519
      %v1521 = vand.u32 %v1520, 4294901760
      %1522 = vmatmul.mubr.f32.gmra.mrb[0].mxu0 %v1521
      %v1523 = vpop.f32.mrb[0].mxu0
      %v1524 = vadd.f32 %v1434, %v1523
      %v1525 = vpop.f32.mrb[0].mxu0
      %1526 = vdwg.mxu0
      %1527 = vmatprep.subr.mxu0 0.0
      %v1528 = vand.u32 %v1413, 4294901760
      %v1529 = vsub.f32 %v1413, %v1528
      %v1530 = vand.u32 %v1529, 4294901760
      %v1531 = vsub.f32 %v1529, %v1530
      %v1532 = vand.u32 %v1531, 4294901760
      %1533 = vmatpush1.msra.mxu0 %v1532
      %1534 = vmatprep.subr.mxu0 0.0
      %v1535 = vand.u32 %v1414, 4294901760
      %v1536 = vsub.f32 %v1414, %v1535
      %v1537 = vand.u32 %v1536, 4294901760
      %v1538 = vsub.f32 %v1536, %v1537
      %v1539 = vand.u32 %v1538, 4294901760
      %1540 = vmatpush1.msra.mxu0 %v1539
      %1541 = vmatprep.subr.mxu0 0.0
      %v1542 = vand.u32 %v1415, 4294901760
      %v1543 = vsub.f32 %v1415, %v1542
      %v1544 = vand.u32 %v1543, 4294901760
      %v1545 = vsub.f32 %v1543, %v1544
      %v1546 = vand.u32 %v1545, 4294901760
      %1547 = vmatpush1.msra.mxu0 %v1546
      %1548 = vmatprep.subr.mxu0 0.0
      %v1549 = vand.u32 %v1416, 4294901760
      %v1550 = vsub.f32 %v1416, %v1549
      %v1551 = vand.u32 %v1550, 4294901760
      %v1552 = vsub.f32 %v1550, %v1551
      %v1553 = vand.u32 %v1552, 4294901760
      %1554 = vmatpush1.msra.mxu0 %v1553
      %1555 = vmatprep.subr.mxu0 0.0
      %v1556 = vand.u32 %v1417, 4294901760
      %v1557 = vsub.f32 %v1417, %v1556
      %v1558 = vand.u32 %v1557, 4294901760
      %v1559 = vsub.f32 %v1557, %v1558
      %v1560 = vand.u32 %v1559, 4294901760
      %1561 = vmatpush1.msra.mxu0 %v1560
      %1562 = vmatprep.subr.mxu0 0.0
      %v1563 = vand.u32 %v1418, 4294901760
      %v1564 = vsub.f32 %v1418, %v1563
      %v1565 = vand.u32 %v1564, 4294901760
      %v1566 = vsub.f32 %v1564, %v1565
      %v1567 = vand.u32 %v1566, 4294901760
      %1568 = vmatpush1.msra.mxu0 %v1567
      %1569 = vmatprep.subr.mxu0 0.0
      %v1570 = vand.u32 %v1419, 4294901760
      %v1571 = vsub.f32 %v1419, %v1570
      %v1572 = vand.u32 %v1571, 4294901760
      %v1573 = vsub.f32 %v1571, %v1572
      %v1574 = vand.u32 %v1573, 4294901760
      %1575 = vmatpush1.msra.mxu0 %v1574
      %1576 = vmatprep.subr.mxu0 0.0
      %v1577 = vand.u32 %v1420, 4294901760
      %v1578 = vsub.f32 %v1420, %v1577
      %v1579 = vand.u32 %v1578, 4294901760
      %v1580 = vsub.f32 %v1578, %v1579
      %v1581 = vand.u32 %v1580, 4294901760
      %1582 = vmatpush1.msra.mxu0 %v1581
      %1583 = vmatprep.subr.mxu0 0.0
      %v1584 = vand.u32 %v1421, 4294901760
      %v1585 = vsub.f32 %v1421, %v1584
      %v1586 = vand.u32 %v1585, 4294901760
      %v1587 = vsub.f32 %v1585, %v1586
      %v1588 = vand.u32 %v1587, 4294901760
      %1589 = vmatpush1.msra.mxu0 %v1588
      %1590 = vmatprep.subr.mxu0 0.0
      %v1591 = vand.u32 %v1422, 4294901760
      %v1592 = vsub.f32 %v1422, %v1591
      %v1593 = vand.u32 %v1592, 4294901760
      %v1594 = vsub.f32 %v1592, %v1593
      %v1595 = vand.u32 %v1594, 4294901760
      %1596 = vmatpush1.msra.mxu0 %v1595
      %1597 = vmatprep.subr.mxu0 0.0
      %v1598 = vand.u32 %v1423, 4294901760
      %v1599 = vsub.f32 %v1423, %v1598
      %v1600 = vand.u32 %v1599, 4294901760
      %v1601 = vsub.f32 %v1599, %v1600
      %v1602 = vand.u32 %v1601, 4294901760
      %1603 = vmatpush1.msra.mxu0 %v1602
      %1604 = vmatprep.subr.mxu0 0.0
      %v1605 = vand.u32 %v1424, 4294901760
      %v1606 = vsub.f32 %v1424, %v1605
      %v1607 = vand.u32 %v1606, 4294901760
      %v1608 = vsub.f32 %v1606, %v1607
      %v1609 = vand.u32 %v1608, 4294901760
      %1610 = vmatpush1.msra.mxu0 %v1609
      %1611 = vmatprep.subr.mxu0 0.0
      %v1612 = vand.u32 %v1425, 4294901760
      %v1613 = vsub.f32 %v1425, %v1612
      %v1614 = vand.u32 %v1613, 4294901760
      %v1615 = vsub.f32 %v1613, %v1614
      %v1616 = vand.u32 %v1615, 4294901760
      %1617 = vmatpush1.msra.mxu0 %v1616
      %1618 = vmatprep.subr.mxu0 0.0
      %v1619 = vand.u32 %v1426, 4294901760
      %v1620 = vsub.f32 %v1426, %v1619
      %v1621 = vand.u32 %v1620, 4294901760
      %v1622 = vsub.f32 %v1620, %v1621
      %v1623 = vand.u32 %v1622, 4294901760
      %1624 = vmatpush1.msra.mxu0 %v1623
      %1625 = vmatprep.subr.mxu0 0.0
      %v1626 = vand.u32 %v1427, 4294901760
      %v1627 = vsub.f32 %v1427, %v1626
      %v1628 = vand.u32 %v1627, 4294901760
      %v1629 = vsub.f32 %v1627, %v1628
      %v1630 = vand.u32 %v1629, 4294901760
      %1631 = vmatpush1.msra.mxu0 %v1630
      %1632 = vmatprep.subr.mxu0 0.0
      %v1633 = vand.u32 %v1428, 4294901760
      %v1634 = vsub.f32 %v1428, %v1633
      %v1635 = vand.u32 %v1634, 4294901760
      %v1636 = vsub.f32 %v1634, %v1635
      %v1637 = vand.u32 %v1636, 4294901760
      %1638 = vmatpush1.msra.mxu0 %v1637
      %1639 = vmatprep.subr.mxu0 0.0
      %1640 = vmatpush1.msra.mxu0 0.0
      %1641 = vmatprep.subr.mxu0 0.0
      %1642 = vmatpush1.msra.mxu0 0.0
      %1643 = vmatprep.subr.mxu0 0.0
      %1644 = vmatpush1.msra.mxu0 0.0
      %1645 = vmatprep.subr.mxu0 0.0
      %1646 = vmatpush1.msra.mxu0 0.0
      %1647 = vmatprep.subr.mxu0 0.0
      %1648 = vmatpush1.msra.mxu0 0.0
      %1649 = vmatprep.subr.mxu0 0.0
      %1650 = vmatpush1.msra.mxu0 0.0
      %1651 = vmatprep.subr.mxu0 0.0
      %1652 = vmatpush1.msra.mxu0 0.0
      %1653 = vmatprep.subr.mxu0 0.0
      %1654 = vmatpush1.msra.mxu0 0.0
      %1655 = vmatprep.subr.mxu0 0.0
      %1656 = vmatpush1.msra.mxu0 0.0
      %1657 = vmatprep.subr.mxu0 0.0
      %1658 = vmatpush1.msra.mxu0 0.0
      %1659 = vmatprep.subr.mxu0 0.0
      %1660 = vmatpush1.msra.mxu0 0.0
      %1661 = vmatprep.subr.mxu0 0.0
      %1662 = vmatpush1.msra.mxu0 0.0
      %1663 = vmatprep.subr.mxu0 0.0
      %1664 = vmatpush1.msra.mxu0 0.0
      %1665 = vmatprep.subr.mxu0 0.0
      %1666 = vmatpush1.msra.mxu0 0.0
      %1667 = vmatprep.subr.mxu0 0.0
      %1668 = vmatpush1.msra.mxu0 0.0
      %1669 = vmatprep.subr.mxu0 0.0
      %1670 = vmatpush1.msra.mxu0 0.0
      %1671 = vmatprep.mubr.f32.mxu0 0.0
      %v1672 = vand.u32 %v1412, 4294901760
      %1673 = vmatmul.mubr.f32.gmra.mrb[0].mxu0 %v1672
      %v1674 = vpop.f32.mrb[0].mxu0
      %v1675 = vadd.f32 %v1524, %v1674
      %v1676 = vpop.f32.mrb[0].mxu0
      %1677 = vdwg.mxu0
      %1678 = vmatprep.subr.mxu0 0.0
      %v1679 = vand.u32 %v1413, 4294901760
      %v1680 = vsub.f32 %v1413, %v1679
      %1681 = vmatpush1.msra.mxu0 %v1680
      %1682 = vmatprep.subr.mxu0 0.0
      %v1683 = vand.u32 %v1414, 4294901760
      %v1684 = vsub.f32 %v1414, %v1683
      %1685 = vmatpush1.msra.mxu0 %v1684
      %1686 = vmatprep.subr.mxu0 0.0
      %v1687 = vand.u32 %v1415, 4294901760
      %v1688 = vsub.f32 %v1415, %v1687
      %1689 = vmatpush1.msra.mxu0 %v1688
      %1690 = vmatprep.subr.mxu0 0.0
      %v1691 = vand.u32 %v1416, 4294901760
      %v1692 = vsub.f32 %v1416, %v1691
      %1693 = vmatpush1.msra.mxu0 %v1692
      %1694 = vmatprep.subr.mxu0 0.0
      %v1695 = vand.u32 %v1417, 4294901760
      %v1696 = vsub.f32 %v1417, %v1695
      %1697 = vmatpush1.msra.mxu0 %v1696
      %1698 = vmatprep.subr.mxu0 0.0
      %v1699 = vand.u32 %v1418, 4294901760
      %v1700 = vsub.f32 %v1418, %v1699
      %1701 = vmatpush1.msra.mxu0 %v1700
      %1702 = vmatprep.subr.mxu0 0.0
      %v1703 = vand.u32 %v1419, 4294901760
      %v1704 = vsub.f32 %v1419, %v1703
      %1705 = vmatpush1.msra.mxu0 %v1704
      %1706 = vmatprep.subr.mxu0 0.0
      %v1707 = vand.u32 %v1420, 4294901760
      %v1708 = vsub.f32 %v1420, %v1707
      %1709 = vmatpush1.msra.mxu0 %v1708
      %1710 = vmatprep.subr.mxu0 0.0
      %v1711 = vand.u32 %v1421, 4294901760
      %v1712 = vsub.f32 %v1421, %v1711
      %1713 = vmatpush1.msra.mxu0 %v1712
      %1714 = vmatprep.subr.mxu0 0.0
      %v1715 = vand.u32 %v1422, 4294901760
      %v1716 = vsub.f32 %v1422, %v1715
      %1717 = vmatpush1.msra.mxu0 %v1716
      %1718 = vmatprep.subr.mxu0 0.0
      %v1719 = vand.u32 %v1423, 4294901760
      %v1720 = vsub.f32 %v1423, %v1719
      %1721 = vmatpush1.msra.mxu0 %v1720
      %1722 = vmatprep.subr.mxu0 0.0
      %v1723 = vand.u32 %v1424, 4294901760
      %v1724 = vsub.f32 %v1424, %v1723
      %1725 = vmatpush1.msra.mxu0 %v1724
      %1726 = vmatprep.subr.mxu0 0.0
      %v1727 = vand.u32 %v1425, 4294901760
      %v1728 = vsub.f32 %v1425, %v1727
      %1729 = vmatpush1.msra.mxu0 %v1728
      %1730 = vmatprep.subr.mxu0 0.0
      %v1731 = vand.u32 %v1426, 4294901760
      %v1732 = vsub.f32 %v1426, %v1731
      %1733 = vmatpush1.msra.mxu0 %v1732
      %1734 = vmatprep.subr.mxu0 0.0
      %v1735 = vand.u32 %v1427, 4294901760
      %v1736 = vsub.f32 %v1427, %v1735
      %1737 = vmatpush1.msra.mxu0 %v1736
      %1738 = vmatprep.subr.mxu0 0.0
      %v1739 = vand.u32 %v1428, 4294901760
      %v1740 = vsub.f32 %v1428, %v1739
      %1741 = vmatpush1.msra.mxu0 %v1740
      %1742 = vmatprep.subr.mxu0 0.0
      %1743 = vmatpush1.msra.mxu0 0.0
      %1744 = vmatprep.subr.mxu0 0.0
      %1745 = vmatpush1.msra.mxu0 0.0
      %1746 = vmatprep.subr.mxu0 0.0
      %1747 = vmatpush1.msra.mxu0 0.0
      %1748 = vmatprep.subr.mxu0 0.0
      %1749 = vmatpush1.msra.mxu0 0.0
      %1750 = vmatprep.subr.mxu0 0.0
      %1751 = vmatpush1.msra.mxu0 0.0
      %1752 = vmatprep.subr.mxu0 0.0
      %1753 = vmatpush1.msra.mxu0 0.0
      %1754 = vmatprep.subr.mxu0 0.0
      %1755 = vmatpush1.msra.mxu0 0.0
      %1756 = vmatprep.subr.mxu0 0.0
      %1757 = vmatpush1.msra.mxu0 0.0
      %1758 = vmatprep.subr.mxu0 0.0
      %1759 = vmatpush1.msra.mxu0 0.0
      %1760 = vmatprep.subr.mxu0 0.0
      %1761 = vmatpush1.msra.mxu0 0.0
      %1762 = vmatprep.subr.mxu0 0.0
      %1763 = vmatpush1.msra.mxu0 0.0
      %1764 = vmatprep.subr.mxu0 0.0
      %1765 = vmatpush1.msra.mxu0 0.0
      %1766 = vmatprep.subr.mxu0 0.0
      %1767 = vmatpush1.msra.mxu0 0.0
      %1768 = vmatprep.subr.mxu0 0.0
      %1769 = vmatpush1.msra.mxu0 0.0
      %1770 = vmatprep.subr.mxu0 0.0
      %1771 = vmatpush1.msra.mxu0 0.0
      %1772 = vmatprep.subr.mxu0 0.0
      %1773 = vmatpush1.msra.mxu0 0.0
      %1774 = vmatprep.mubr.f32.mxu0 0.0
      %v1775 = vand.u32 %v1412, 4294901760
      %v1776 = vsub.f32 %v1412, %v1775
      %1777 = vmatmul.mubr.f32.gmra.mrb[0].mxu0 %v1776
      %v1778 = vpop.f32.mrb[0].mxu0
      %v1779 = vadd.f32 %v1675, %v1778
      %v1780 = vpop.f32.mrb[0].mxu0
      %1781 = vdwg.mxu0
      %1782 = vmatprep.subr.mxu0 0.0
      %v1783 = vand.u32 %v1413, 4294901760
      %1784 = vmatpush1.msra.mxu0 %v1783
      %1785 = vmatprep.subr.mxu0 0.0
      %v1786 = vand.u32 %v1414, 4294901760
      %1787 = vmatpush1.msra.mxu0 %v1786
      %1788 = vmatprep.subr.mxu0 0.0
      %v1789 = vand.u32 %v1415, 4294901760
      %1790 = vmatpush1.msra.mxu0 %v1789
      %1791 = vmatprep.subr.mxu0 0.0
      %v1792 = vand.u32 %v1416, 4294901760
      %1793 = vmatpush1.msra.mxu0 %v1792
      %1794 = vmatprep.subr.mxu0 0.0
      %v1795 = vand.u32 %v1417, 4294901760
      %1796 = vmatpush1.msra.mxu0 %v1795
      %1797 = vmatprep.subr.mxu0 0.0
      %v1798 = vand.u32 %v1418, 4294901760
      %1799 = vmatpush1.msra.mxu0 %v1798
      %1800 = vmatprep.subr.mxu0 0.0
      %v1801 = vand.u32 %v1419, 4294901760
      %1802 = vmatpush1.msra.mxu0 %v1801
      %1803 = vmatprep.subr.mxu0 0.0
      %v1804 = vand.u32 %v1420, 4294901760
      %1805 = vmatpush1.msra.mxu0 %v1804
      %1806 = vmatprep.subr.mxu0 0.0
      %v1807 = vand.u32 %v1421, 4294901760
      %1808 = vmatpush1.msra.mxu0 %v1807
      %1809 = vmatprep.subr.mxu0 0.0
      %v1810 = vand.u32 %v1422, 4294901760
      %1811 = vmatpush1.msra.mxu0 %v1810
      %1812 = vmatprep.subr.mxu0 0.0
      %v1813 = vand.u32 %v1423, 4294901760
      %1814 = vmatpush1.msra.mxu0 %v1813
      %1815 = vmatprep.subr.mxu0 0.0
      %v1816 = vand.u32 %v1424, 4294901760
      %1817 = vmatpush1.msra.mxu0 %v1816
      %1818 = vmatprep.subr.mxu0 0.0
      %v1819 = vand.u32 %v1425, 4294901760
      %1820 = vmatpush1.msra.mxu0 %v1819
      %1821 = vmatprep.subr.mxu0 0.0
      %v1822 = vand.u32 %v1426, 4294901760
      %1823 = vmatpush1.msra.mxu0 %v1822
      %1824 = vmatprep.subr.mxu0 0.0
      %v1825 = vand.u32 %v1427, 4294901760
      %1826 = vmatpush1.msra.mxu0 %v1825
      %1827 = vmatprep.subr.mxu0 0.0
      %v1828 = vand.u32 %v1428, 4294901760
      %1829 = vmatpush1.msra.mxu0 %v1828
      %1830 = vmatprep.subr.mxu0 0.0
      %1831 = vmatpush1.msra.mxu0 0.0
      %1832 = vmatprep.subr.mxu0 0.0
      %1833 = vmatpush1.msra.mxu0 0.0
      %1834 = vmatprep.subr.mxu0 0.0
      %1835 = vmatpush1.msra.mxu0 0.0
      %1836 = vmatprep.subr.mxu0 0.0
      %1837 = vmatpush1.msra.mxu0 0.0
      %1838 = vmatprep.subr.mxu0 0.0
      %1839 = vmatpush1.msra.mxu0 0.0
      %1840 = vmatprep.subr.mxu0 0.0
      %1841 = vmatpush1.msra.mxu0 0.0
      %1842 = vmatprep.subr.mxu0 0.0
      %1843 = vmatpush1.msra.mxu0 0.0
      %1844 = vmatprep.subr.mxu0 0.0
      %1845 = vmatpush1.msra.mxu0 0.0
      %1846 = vmatprep.subr.mxu0 0.0
      %1847 = vmatpush1.msra.mxu0 0.0
      %1848 = vmatprep.subr.mxu0 0.0
      %1849 = vmatpush1.msra.mxu0 0.0
      %1850 = vmatprep.subr.mxu0 0.0
      %1851 = vmatpush1.msra.mxu0 0.0
      %1852 = vmatprep.subr.mxu0 0.0
      %1853 = vmatpush1.msra.mxu0 0.0
      %1854 = vmatprep.subr.mxu0 0.0
      %1855 = vmatpush1.msra.mxu0 0.0
      %1856 = vmatprep.subr.mxu0 0.0
      %1857 = vmatpush1.msra.mxu0 0.0
      %1858 = vmatprep.subr.mxu0 0.0
      %1859 = vmatpush1.msra.mxu0 0.0
      %1860 = vmatprep.subr.mxu0 0.0
      %1861 = vmatpush1.msra.mxu0 0.0
      %1862 = vmatprep.mubr.f32.mxu0 0.0
      %v1863 = vand.u32 %v1412, 4294901760
      %v1864 = vsub.f32 %v1412, %v1863
      %v1865 = vand.u32 %v1864, 4294901760
      %1866 = vmatmul.mubr.f32.gmra.mrb[0].mxu0 %v1865
      %v1867 = vpop.f32.mrb[0].mxu0
      %v1868 = vadd.f32 %v1779, %v1867
      %v1869 = vpop.f32.mrb[0].mxu0
      %1870 = vdwg.mxu0
      %1871 = vmatprep.subr.mxu0 0.0
      %v1872 = vand.u32 %v1413, 4294901760
      %v1873 = vsub.f32 %v1413, %v1872
      %v1874 = vand.u32 %v1873, 4294901760
      %1875 = vmatpush1.msra.mxu0 %v1874
      %1876 = vmatprep.subr.mxu0 0.0
      %v1877 = vand.u32 %v1414, 4294901760
      %v1878 = vsub.f32 %v1414, %v1877
      %v1879 = vand.u32 %v1878, 4294901760
      %1880 = vmatpush1.msra.mxu0 %v1879
      %1881 = vmatprep.subr.mxu0 0.0
      %v1882 = vand.u32 %v1415, 4294901760
      %v1883 = vsub.f32 %v1415, %v1882
      %v1884 = vand.u32 %v1883, 4294901760
      %1885 = vmatpush1.msra.mxu0 %v1884
      %1886 = vmatprep.subr.mxu0 0.0
      %v1887 = vand.u32 %v1416, 4294901760
      %v1888 = vsub.f32 %v1416, %v1887
      %v1889 = vand.u32 %v1888, 4294901760
      %1890 = vmatpush1.msra.mxu0 %v1889
      %1891 = vmatprep.subr.mxu0 0.0
      %v1892 = vand.u32 %v1417, 4294901760
      %v1893 = vsub.f32 %v1417, %v1892
      %v1894 = vand.u32 %v1893, 4294901760
      %1895 = vmatpush1.msra.mxu0 %v1894
      %1896 = vmatprep.subr.mxu0 0.0
      %v1897 = vand.u32 %v1418, 4294901760
      %v1898 = vsub.f32 %v1418, %v1897
      %v1899 = vand.u32 %v1898, 4294901760
      %1900 = vmatpush1.msra.mxu0 %v1899
      %1901 = vmatprep.subr.mxu0 0.0
      %v1902 = vand.u32 %v1419, 4294901760
      %v1903 = vsub.f32 %v1419, %v1902
      %v1904 = vand.u32 %v1903, 4294901760
      %1905 = vmatpush1.msra.mxu0 %v1904
      %1906 = vmatprep.subr.mxu0 0.0
      %v1907 = vand.u32 %v1420, 4294901760
      %v1908 = vsub.f32 %v1420, %v1907
      %v1909 = vand.u32 %v1908, 4294901760
      %1910 = vmatpush1.msra.mxu0 %v1909
      %1911 = vmatprep.subr.mxu0 0.0
      %v1912 = vand.u32 %v1421, 4294901760
      %v1913 = vsub.f32 %v1421, %v1912
      %v1914 = vand.u32 %v1913, 4294901760
      %1915 = vmatpush1.msra.mxu0 %v1914
      %1916 = vmatprep.subr.mxu0 0.0
      %v1917 = vand.u32 %v1422, 4294901760
      %v1918 = vsub.f32 %v1422, %v1917
      %v1919 = vand.u32 %v1918, 4294901760
      %1920 = vmatpush1.msra.mxu0 %v1919
      %1921 = vmatprep.subr.mxu0 0.0
      %v1922 = vand.u32 %v1423, 4294901760
      %v1923 = vsub.f32 %v1423, %v1922
      %v1924 = vand.u32 %v1923, 4294901760
      %1925 = vmatpush1.msra.mxu0 %v1924
      %1926 = vmatprep.subr.mxu0 0.0
      %v1927 = vand.u32 %v1424, 4294901760
      %v1928 = vsub.f32 %v1424, %v1927
      %v1929 = vand.u32 %v1928, 4294901760
      %1930 = vmatpush1.msra.mxu0 %v1929
      %1931 = vmatprep.subr.mxu0 0.0
      %v1932 = vand.u32 %v1425, 4294901760
      %v1933 = vsub.f32 %v1425, %v1932
      %v1934 = vand.u32 %v1933, 4294901760
      %1935 = vmatpush1.msra.mxu0 %v1934
      %1936 = vmatprep.subr.mxu0 0.0
      %v1937 = vand.u32 %v1426, 4294901760
      %v1938 = vsub.f32 %v1426, %v1937
      %v1939 = vand.u32 %v1938, 4294901760
      %1940 = vmatpush1.msra.mxu0 %v1939
      %1941 = vmatprep.subr.mxu0 0.0
      %v1942 = vand.u32 %v1427, 4294901760
      %v1943 = vsub.f32 %v1427, %v1942
      %v1944 = vand.u32 %v1943, 4294901760
      %1945 = vmatpush1.msra.mxu0 %v1944
      %1946 = vmatprep.subr.mxu0 0.0
      %v1947 = vand.u32 %v1428, 4294901760
      %v1948 = vsub.f32 %v1428, %v1947
      %v1949 = vand.u32 %v1948, 4294901760
      %1950 = vmatpush1.msra.mxu0 %v1949
      %1951 = vmatprep.subr.mxu0 0.0
      %1952 = vmatpush1.msra.mxu0 0.0
      %1953 = vmatprep.subr.mxu0 0.0
      %1954 = vmatpush1.msra.mxu0 0.0
      %1955 = vmatprep.subr.mxu0 0.0
      %1956 = vmatpush1.msra.mxu0 0.0
      %1957 = vmatprep.subr.mxu0 0.0
      %1958 = vmatpush1.msra.mxu0 0.0
      %1959 = vmatprep.subr.mxu0 0.0
      %1960 = vmatpush1.msra.mxu0 0.0
      %1961 = vmatprep.subr.mxu0 0.0
      %1962 = vmatpush1.msra.mxu0 0.0
      %1963 = vmatprep.subr.mxu0 0.0
      %1964 = vmatpush1.msra.mxu0 0.0
      %1965 = vmatprep.subr.mxu0 0.0
      %1966 = vmatpush1.msra.mxu0 0.0
      %1967 = vmatprep.subr.mxu0 0.0
      %1968 = vmatpush1.msra.mxu0 0.0
      %1969 = vmatprep.subr.mxu0 0.0
      %1970 = vmatpush1.msra.mxu0 0.0
      %1971 = vmatprep.subr.mxu0 0.0
      %1972 = vmatpush1.msra.mxu0 0.0
      %1973 = vmatprep.subr.mxu0 0.0
      %1974 = vmatpush1.msra.mxu0 0.0
      %1975 = vmatprep.subr.mxu0 0.0
      %1976 = vmatpush1.msra.mxu0 0.0
      %1977 = vmatprep.subr.mxu0 0.0
      %1978 = vmatpush1.msra.mxu0 0.0
      %1979 = vmatprep.subr.mxu0 0.0
      %1980 = vmatpush1.msra.mxu0 0.0
      %1981 = vmatprep.subr.mxu0 0.0
      %1982 = vmatpush1.msra.mxu0 0.0
      %1983 = vmatprep.mubr.f32.mxu0 0.0
      %v1984 = vand.u32 %v1412, 4294901760
      %1985 = vmatmul.mubr.f32.gmra.mrb[0].mxu0 %v1984
      %v1986 = vpop.f32.mrb[0].mxu0
      %v1987 = vadd.f32 %v1868, %v1986
      %v1988 = vpop.f32.mrb[0].mxu0
      %1989 = vdwg.mxu0
      %1990 = vmatprep.subr.mxu0 0.0
      %v1991 = vand.u32 %v1413, 4294901760
      %1992 = vmatpush1.msra.mxu0 %v1991
      %1993 = vmatprep.subr.mxu0 0.0
      %v1994 = vand.u32 %v1414, 4294901760
      %1995 = vmatpush1.msra.mxu0 %v1994
      %1996 = vmatprep.subr.mxu0 0.0
      %v1997 = vand.u32 %v1415, 4294901760
      %1998 = vmatpush1.msra.mxu0 %v1997
      %1999 = vmatprep.subr.mxu0 0.0
      %v2000 = vand.u32 %v1416, 4294901760
      %2001 = vmatpush1.msra.mxu0 %v2000
      %2002 = vmatprep.subr.mxu0 0.0
      %v2003 = vand.u32 %v1417, 4294901760
      %2004 = vmatpush1.msra.mxu0 %v2003
      %2005 = vmatprep.subr.mxu0 0.0
      %v2006 = vand.u32 %v1418, 4294901760
      %2007 = vmatpush1.msra.mxu0 %v2006
      %2008 = vmatprep.subr.mxu0 0.0
      %v2009 = vand.u32 %v1419, 4294901760
      %2010 = vmatpush1.msra.mxu0 %v2009
      %2011 = vmatprep.subr.mxu0 0.0
      %v2012 = vand.u32 %v1420, 4294901760
      %2013 = vmatpush1.msra.mxu0 %v2012
      %2014 = vmatprep.subr.mxu0 0.0
      %v2015 = vand.u32 %v1421, 4294901760
      %2016 = vmatpush1.msra.mxu0 %v2015
      %2017 = vmatprep.subr.mxu0 0.0
      %v2018 = vand.u32 %v1422, 4294901760
      %2019 = vmatpush1.msra.mxu0 %v2018
      %2020 = vmatprep.subr.mxu0 0.0
      %v2021 = vand.u32 %v1423, 4294901760
      %2022 = vmatpush1.msra.mxu0 %v2021
      %2023 = vmatprep.subr.mxu0 0.0
      %v2024 = vand.u32 %v1424, 4294901760
      %2025 = vmatpush1.msra.mxu0 %v2024
      %2026 = vmatprep.subr.mxu0 0.0
      %v2027 = vand.u32 %v1425, 4294901760
      %2028 = vmatpush1.msra.mxu0 %v2027
      %2029 = vmatprep.subr.mxu0 0.0
      %v2030 = vand.u32 %v1426, 4294901760
      %2031 = vmatpush1.msra.mxu0 %v2030
      %2032 = vmatprep.subr.mxu0 0.0
      %v2033 = vand.u32 %v1427, 4294901760
      %2034 = vmatpush1.msra.mxu0 %v2033
      %2035 = vmatprep.subr.mxu0 0.0
      %v2036 = vand.u32 %v1428, 4294901760
      %2037 = vmatpush1.msra.mxu0 %v2036
      %2038 = vmatprep.subr.mxu0 0.0
      %2039 = vmatpush1.msra.mxu0 0.0
      %2040 = vmatprep.subr.mxu0 0.0
      %2041 = vmatpush1.msra.mxu0 0.0
      %2042 = vmatprep.subr.mxu0 0.0
      %2043 = vmatpush1.msra.mxu0 0.0
      %2044 = vmatprep.subr.mxu0 0.0
      %2045 = vmatpush1.msra.mxu0 0.0
      %2046 = vmatprep.subr.mxu0 0.0
      %2047 = vmatpush1.msra.mxu0 0.0
      %2048 = vmatprep.subr.mxu0 0.0
      %2049 = vmatpush1.msra.mxu0 0.0
      %2050 = vmatprep.subr.mxu0 0.0
      %2051 = vmatpush1.msra.mxu0 0.0
      %2052 = vmatprep.subr.mxu0 0.0
      %2053 = vmatpush1.msra.mxu0 0.0
      %2054 = vmatprep.subr.mxu0 0.0
      %2055 = vmatpush1.msra.mxu0 0.0
      %2056 = vmatprep.subr.mxu0 0.0
      %2057 = vmatpush1.msra.mxu0 0.0
      %2058 = vmatprep.subr.mxu0 0.0
      %2059 = vmatpush1.msra.mxu0 0.0
      %2060 = vmatprep.subr.mxu0 0.0
      %2061 = vmatpush1.msra.mxu0 0.0
      %2062 = vmatprep.subr.mxu0 0.0
      %2063 = vmatpush1.msra.mxu0 0.0
      %2064 = vmatprep.subr.mxu0 0.0
      %2065 = vmatpush1.msra.mxu0 0.0
      %2066 = vmatprep.subr.mxu0 0.0
      %2067 = vmatpush1.msra.mxu0 0.0
      %2068 = vmatprep.subr.mxu0 0.0
      %2069 = vmatpush1.msra.mxu0 0.0
      %2070 = vmatprep.mubr.f32.mxu0 0.0
      %v2071 = vand.u32 %v1412, 4294901760
      %2072 = vmatmul.mubr.f32.gmra.mrb[0].mxu0 %v2071
      %v2073 = vpop.f32.mrb[0].mxu0
      %v2074 = vadd.f32 %v1987, %v2073
      %v2075 = vpop.f32.mrb[0].mxu0
      %2076 = vdwg.mxu0
      %vm2077 = vcmask 64512
      %2078 = vst.msk [vmem:[%s273] sm:$0xff] %vm2077, %v2074
      %p2079 = scmp.lt.s32.totalorder %s18, 1
      %s2080 = scalar_select %p2079, %s18, 1
      %s2081 = smul.addr %s2080, 8
      %s2082 = scalar_lea.vmem %s7, %s2081
      // Predicated region
      $region49: #{dqn_forward.1} parent=47 // pred_check
        %p2083 = pneg %p188
      $region50: #{dqn_forward.1} parent=47 // pred_check_branch
        %2085 = sbr.rel (%p2083) target = $region52
      $region51: #{dqn_forward.1} parent=47 // pred_region
        _
      $region52: #{dqn_forward.1} parent=47 // pred_fallthru
        _
    $region48: #{dqn_forward.1} parent=5 // pred_fallthru
      _
    %p2086 = scmp.le.s32.totalorder 2, %s13
    // Predicated region
    $region53: #{dqn_forward.1} parent=5 // pred_check
      %p2087 = pneg %p2086
    $region54: #{dqn_forward.1} parent=5 // pred_check_branch
      %2089 = sbr.rel (%p2087) target = $region56
    $region55: #{dqn_forward.1} parent=5 // pred_region
      %s2090 = ssub.s32 %s13, 2
      // Predicated region
      $region57: #{dqn_forward.1} parent=55 // pred_check
        %p2091 = pneg %p194
      $region58: #{dqn_forward.1} parent=55 // pred_check_branch
        %2093 = sbr.rel (%p2091) target = $region60
      $region59: #{dqn_forward.1} parent=55 // pred_region
        %p2094 = scmp.lt.s32.totalorder %s19, 1
        %s2095 = scalar_select %p2094, %s19, 1
        %s2096 = smul.addr %s2095, 8
        %s2097 = scalar_lea.vmem %s7, %s2096
      $region60: #{dqn_forward.1} parent=55 // pred_fallthru
        _
    $region56: #{dqn_forward.1} parent=5 // pred_fallthru
      _
  $region6: #{dqn_forward.1} parent=0 // loop_footer
    %s17 = sadd.s32 1, %s13
  $region7: #{dqn_forward.1} parent=0 // loop_footer_branch
    %12 = sbr.rel target = $region3
  $region8: #{dqn_forward.1} parent=0 // loop_exit
    _

</llo_original>
